<compile_context>
chip_gen: v6e
topology: v6e:2x2x1
jax: 0.10.0
libtpu: 0.0.40
codegen_flags: <defaults>
</compile_context>

<pallas_src>
import math
import functools

import numpy as np
import jax
import jax.numpy as jnp
from jax import lax
from jax.experimental import pallas as pl
from jax.experimental.pallas import tpu as pltpu


def _pick_channel_chunk(C, W, budget_bytes=4 << 20, dtype_bytes=2):
    """Channel chunk Cc (<=128) whose (Cc*W, Cc) segment-sum RHS stays under budget.

    Prefers a divisor of C (no channel padding) when it is at least half the
    unconstrained best; otherwise channels are padded up to a multiple of Cc.
    """
    best = 1
    for cand in range(1, min(C, 128) + 1):
        if cand * cand * W * dtype_bytes <= budget_bytes:
            best = cand
    div = 1
    for cand in range(1, best + 1):
        if C % cand == 0:
            div = cand
    return div if 2 * div >= best else best


def make_roi_align_kernel(H, W, Cp, Ph, Pw, T, Cc, cdtype):
    """ROIAlign (aligned=False, maskrcnn_benchmark semantics) for T RoIs per grid step."""
    TPh = T * Ph
    CcW = Cc * W
    nchunks = Cp // Cc

    def lane_tile(x, reps):
        # Repeat `x` `reps` times along the lane (last) axis via concat doubling.
        if reps == 1:
            return x
        parts, cur, n = [], x, reps
        while n > 0:
            if n & 1:
                parts.append(cur)
            n >>= 1
            if n:
                cur = jnp.concatenate([cur, cur], axis=-1)
        return parts[0] if len(parts) == 1 else jnp.concatenate(parts, axis=-1)

    def kernel(blk_ref, any_ref, ay_ref, ax_ref, seg_ref, feat_ref, out_ref):
        t = pl.program_id(0)

        @pl.when(any_ref[t] == 0)
        def _():
            # No RoI of this tile maps to this FPN level: lane-dense zero fill, no compute.
            # (The feature DMA was parked on the previously fetched image id.)
            out_ref[...] = jnp.zeros_like(out_ref)

        @pl.when(any_ref[t] != 0)
        def _():
            ay = ay_ref[...]          # (T*Ph, H)        precomputed y-weights (masked)
            ax = ax_ref[...]          # (T*Ph, Pw*W)     precomputed x-weights
            seg = seg_ref[...]        # (Cc*W, Cc)       constant 0/1 segment-sum RHS
            feat = feat_ref[0]        # (H, Cp*W)        this tile's image (c-major, w-minor)

            # Channel-replicated x-weight tables, hoisted out of the chunk loop.
            ax_rep = [lane_tile(ax[:, q * W:(q + 1) * W], Cc) for q in range(Pw)]

            res_chunks = []
            for ch in range(nchunks):
                fchunk = feat if nchunks == 1 else feat[:, ch * CcW:(ch + 1) * CcW]
                # stage A (MXU): contract H.
                b1c = jnp.dot(ay, fchunk,
                              preferred_element_type=jnp.float32).astype(cdtype)
                # stage B (MXU): stack the Pw weighted copies along M so the constant
                # seg RHS is loaded once per chunk instead of once per output column.
                stacked = jnp.concatenate([b1c * ax_rep[q] for q in range(Pw)], axis=0)
                res_chunks.append(
                    jnp.dot(stacked, seg, preferred_element_type=jnp.float32))

            # Assemble one lane-dense (T*Ph, Pw*Cp) block; single full-width store.
            pieces = []
            for q in range(Pw):
                for ch in range(nchunks):
                    pieces.append(res_chunks[ch][q * TPh:(q + 1) * TPh, :])
            blk = pieces[0] if len(pieces) == 1 else jnp.concatenate(pieces, axis=-1)
            out_ref[...] = blk.astype(out_ref.dtype)

    return kernel


def _roi_align_level(feat_blk, tile_any, ay, ax, seg, feat_hcw,
                     *, H, W, Cp, Ph, Pw, T, Cc, cdtype):
    num_tiles = int(tile_any.shape[0])
    rows = int(ay.shape[0])             # R_pad * Ph
    kernel = make_roi_align_kernel(H, W, Cp, Ph, Pw, T, Cc, cdtype)
    return pl.pallas_call(
        kernel,
        out_shape=jax.ShapeDtypeStruct((rows, Pw * Cp), jnp.float32),
        grid_spec=pltpu.PrefetchScalarGridSpec(
            num_scalar_prefetch=1,                                      # per-tile image ids -> SMEM
            grid=(num_tiles,),
            in_specs=[
                pl.BlockSpec(memory_space=pltpu.MemorySpace.SMEM),      # tile_any (num_tiles,)
                pl.BlockSpec((T * Ph, H), lambda t, blk: (t, 0)),       # AY
                pl.BlockSpec((T * Ph, Pw * W), lambda t, blk: (t, 0)),  # AX
                pl.BlockSpec((Cc * W, Cc), lambda t, blk: (0, 0)),      # constant seg RHS
                pl.BlockSpec((1, H, Cp * W), lambda t, blk: (blk[t], 0, 0)),  # features
            ],
            out_specs=pl.BlockSpec((T * Ph, Pw * Cp), lambda t, blk: (t, 0)),
        ),
        compiler_params=pltpu.CompilerParams(
            dimension_semantics=("parallel",),
            vmem_limit_bytes=64 * 1024 * 1024,
        ),
    )(feat_blk, tile_any, ay, ax, seg, feat_hcw)


def _dense_axis_weights(start, binsz, P, size, sr):
    """Dense separable ROIAlign weights, (R, P, size) f32, averaged over sr samples."""
    p = jnp.arange(P, dtype=jnp.float32)[None, :, None]
    s = jnp.arange(sr, dtype=jnp.float32)[None, None, :]
    st = start[:, None, None]
    bz = binsz[:, None, None]
    coord = st + p * bz + (s + 0.5) * bz / float(sr)                  # (R, P, sr)
    valid = ((coord >= -1.0) & (coord <= float(size))).astype(jnp.float32)
    c0 = jnp.clip(coord, 0.0, float(size - 1))
    low = jnp.floor(c0)
    frac = c0 - low
    hi = jnp.minimum(low + 1.0, float(size - 1))
    wlo = valid * (1.0 - frac) / float(sr)
    whi = valid * frac / float(sr)
    low_i = low.astype(jnp.int32)[..., None]
    hi_i = hi.astype(jnp.int32)[..., None]
    grid = jnp.arange(size, dtype=jnp.int32)[None, None, None, :]
    w = (jnp.where(grid == low_i, wlo[..., None], 0.0)
         + jnp.where(grid == hi_i, whi[..., None], 0.0))              # (R, P, sr, size)
    return w.sum(axis=2)                                              # (R, P, size)


def pooler_forward(x_levels_nchw, boxes_per_image, *, scales, output_size, sampling_ratio,
                   roi_tile=8, compute_dtype=jnp.bfloat16):
    """Pooler.forward.

    x_levels_nchw : list of (N, C, H_l, W_l) float32 feature maps (PyTorch NCHW).
    boxes_per_image: list of (n_i, 4) float32 xyxy boxes, one per image.
    roi_tile       : RoIs per grid step (raise to 16-32 on v6e/v7x for many RoIs/image).
    Returns (num_rois, C, Ph, Pw) float32 (PyTorch ordering).
    """
    Ph, Pw = output_size
    sr = int(sampling_ratio)
    T = int(roi_tile)
    assert sr > 0, "adaptive sampling_ratio (<=0) is not supported"
    assert (T * Ph) % 8 == 0, "roi_tile * output_h must be a multiple of 8"
    N, C = int(x_levels_nchw[0].shape[0]), int(x_levels_nchw[0].shape[1])

    # ---- convert_to_roi_format, padded per image so every tile of T RoIs is one image ----
    padded, bids, valids, keep = [], [], [], []
    off = 0
    for i, b in enumerate(boxes_per_image):
        b = jnp.asarray(b, jnp.float32)
        n = int(b.shape[0])
        n_pad = ((n + T - 1) // T) * T
        if n_pad > n:
            b = jnp.concatenate([b, jnp.zeros((n_pad - n, 4), jnp.float32)], axis=0)
        padded.append(b)
        bids.append(jnp.full((n_pad,), i, dtype=jnp.int32))
        v = np.zeros((n_pad,), np.float32)
        v[:n] = 1.0
        valids.append(v)
        keep.append((off, n))
        off += n_pad
    rois = jnp.concatenate(padded, axis=0)                  # (R_pad, 4)
    batch_ids = jnp.concatenate(bids, axis=0)               # (R_pad,)
    valid = jnp.asarray(np.concatenate(valids, axis=0))     # (R_pad,)
    R_pad = int(rois.shape[0])
    num_tiles = R_pad // T
    tile_batch = batch_ids.reshape(num_tiles, T)[:, 0]      # image id of each RoI tile

    # ---- LevelMapper (BoxList.area() with TO_REMOVE=1 for xyxy boxes) ----
    k_min = -math.log2(scales[0])
    k_max = -math.log2(scales[-1])
    widths = rois[:, 2] - rois[:, 0] + 1.0
    heights = rois[:, 3] - rois[:, 1] + 1.0
    s = jnp.sqrt(widths * heights)
    target_lvls = jnp.floor(4.0 + jnp.log2(s / 224.0 + 1e-6))
    target_lvls = jnp.clip(target_lvls, k_min, k_max)
    levels = (target_lvls - k_min).astype(jnp.int32)

    out_sum = None
    for lvl, (feat, scale) in enumerate(zip(x_levels_nchw, scales)):
        _, _, H, W = feat.shape
        H, W = int(H), int(W)
        scale = float(scale)
        Cc = _pick_channel_chunk(C, W, dtype_bytes=jnp.dtype(compute_dtype).itemsize)
        Cp = ((C + Cc - 1) // Cc) * Cc

        # NCHW -> (N, H, Cp*W): channels outer / width inner on the lane axis.
        f = jnp.transpose(feat, (0, 2, 1, 3))                         # (N, H, C, W)
        if Cp > C:
            f = jnp.concatenate([f, jnp.zeros((N, H, Cp - C, W), f.dtype)], axis=2)
        feat_hcw = f.reshape(N, H, Cp * W).astype(compute_dtype)

        active = ((levels == lvl) & (valid > 0)).astype(jnp.float32)   # (R_pad,)
        tile_act = active.reshape(num_tiles, T).max(axis=1) > 0        # (num_tiles,)
        # Park inactive tiles on the last fetched image so their feature DMA is elided.
        feat_blk = lax.cummax(jnp.where(tile_act, tile_batch, 0), axis=0).astype(jnp.int32)
        tile_any = tile_act.astype(jnp.int32)

        # Dense separable bilinear weight tables (level mask folded into AY).
        start_w = rois[:, 0] * scale
        start_h = rois[:, 1] * scale
        roi_w = jnp.maximum(rois[:, 2] * scale - start_w, 1.0)
        roi_h = jnp.maximum(rois[:, 3] * scale - start_h, 1.0)
        ayw = _dense_axis_weights(start_h, roi_h / float(Ph), Ph, H, sr)   # (R_pad, Ph, H)
        axw = _dense_axis_weights(start_w, roi_w / float(Pw), Pw, W, sr)   # (R_pad, Pw, W)
        ay = (ayw * active[:, None, None]).reshape(R_pad * Ph, H).astype(compute_dtype)
        ax = jnp.broadcast_to(axw[:, None], (R_pad, Ph, Pw, W)
                              ).reshape(R_pad * Ph, Pw * W).astype(compute_dtype)

        # Constant 0/1 segment-sum RHS: reduces over w within each channel block.
        seg = ((jnp.arange(Cc * W) // W)[:, None] == jnp.arange(Cc)[None, :]
               ).astype(compute_dtype)

        o = _roi_align_level(feat_blk, tile_any, ay, ax, seg, feat_hcw,
                             H=H, W=W, Cp=Cp, Ph=Ph, Pw=Pw, T=T, Cc=Cc,
                             cdtype=compute_dtype)
        o = o.reshape(R_pad, Ph, Pw, Cp)[..., :C]
        out_sum = o if out_sum is None else out_sum + o   # each RoI active on one level

    # (R_pad, Ph, Pw, C) -> (R_pad, C, Ph, Pw), then drop the per-image padding rows.
    res = out_sum.transpose(0, 3, 1, 2)
    return jnp.concatenate([res[o0:o0 + n] for (o0, n) in keep], axis=0)


def _pooler_reference(x_levels_nchw, boxes_per_image, *, scales, output_size, sampling_ratio):
    """Pure-JAX (XLA, f32) reference implementation of Pooler.forward."""
    Ph, Pw = output_size
    sr = int(sampling_ratio)
    rois = jnp.concatenate([jnp.asarray(b, jnp.float32) for b in boxes_per_image], axis=0)
    bids = jnp.concatenate([jnp.full((int(b.shape[0]),), i, jnp.int32)
                            for i, b in enumerate(boxes_per_image)], axis=0)
    k_min = -math.log2(scales[0])
    k_max = -math.log2(scales[-1])
    widths = rois[:, 2] - rois[:, 0] + 1.0
    heights = rois[:, 3] - rois[:, 1] + 1.0
    lv = jnp.clip(jnp.floor(4.0 + jnp.log2(jnp.sqrt(widths * heights) / 224.0 + 1e-6)),
                  k_min, k_max)
    levels = (lv - k_min).astype(jnp.int32)
    C = int(x_levels_nchw[0].shape[1])
    out = jnp.zeros((int(rois.shape[0]), C, Ph, Pw), jnp.float32)
    for lvl, (feat, scale) in enumerate(zip(x_levels_nchw, scales)):
        _, _, H, W = feat.shape
        H, W = int(H), int(W)
        scale = float(scale)
        start_w = rois[:, 0] * scale
        start_h = rois[:, 1] * scale
        roi_w = jnp.maximum(rois[:, 2] * scale - start_w, 1.0)
        roi_h = jnp.maximum(rois[:, 3] * scale - start_h, 1.0)
        ayw = _dense_axis_weights(start_h, roi_h / float(Ph), Ph, H, sr)
        axw = _dense_axis_weights(start_w, roi_w / float(Pw), Pw, W, sr)
        f = feat.astype(jnp.float32)[bids]                           # (R, C, H, W)
        o = jnp.einsum('rph,rqw,rchw->rcpq', ayw, axw, f)
        mask = (levels == lvl).astype(jnp.float32)[:, None, None, None]
        out = out + o * mask
    return out


if __name__ == "__main__":
    # Pooler(output_size=(4, 4), scales=(1/4, 1/8), sampling_ratio=2), pooler_type='ROIAlign'
    output_size = (4, 4)
    scales = (0.25, 0.125)
    sampling_ratio = 2

    key = jax.random.PRNGKey(0)
    kf0, kf1, kb = jax.random.split(key, 3)

    N, C = 2, 32
    IMG = 256
    x_levels = [
        jax.random.normal(kf0, (N, C, int(IMG * scales[0]), int(IMG * scales[0])), jnp.float32),
        jax.random.normal(kf1, (N, C, int(IMG * scales[1]), int(IMG * scales[1])), jnp.float32),
    ]

    # 3 boxes per image, mixing small / large boxes so both FPN levels are exercised.
    boxes_per_image = []
    for img in range(N):
        kk = jax.random.fold_in(kb, img)
        ka, kw = jax.random.split(kk)
        xy1 = jax.random.uniform(ka, (3, 2), minval=0.0, maxval=60.0)
        wh = jax.random.uniform(kw, (3, 2), minval=20.0, maxval=180.0)
        xy2 = jnp.minimum(xy1 + wh, float(IMG - 1))
        boxes_per_image.append(jnp.concatenate([xy1, xy2], axis=1).astype(jnp.float32))

    fwd = functools.partial(
        pooler_forward, scales=scales, output_size=output_size, sampling_ratio=sampling_ratio
    )
    result = fwd(x_levels, boxes_per_image)
    jax.block_until_ready(result)

    expected_shape = (sum(b.shape[0] for b in boxes_per_image), C, output_size[0], output_size[1])
    assert result.shape == expected_shape, (result.shape, expected_shape)
    assert bool(jnp.all(jnp.isfinite(result)))

    # Validate the bf16 kernel path against a float32 XLA reference.
    ref = _pooler_reference(x_levels, boxes_per_image, scales=scales,
                            output_size=output_size, sampling_ratio=sampling_ratio)
    max_err = float(jnp.max(jnp.abs(result - ref)))
    max_ref = float(jnp.max(jnp.abs(ref)))
    assert max_err <= 0.1 + 0.02 * max_ref, ("bf16 kernel mismatch vs f32 ref", max_err, max_ref)

    print("KERNEL_OK")
</pallas_src>

<mosaic_0001>
module attributes {stable_mosaic.version = 11 : i64} {
  func.func @kernel(%arg0: i32, %arg1: memref<2xi32, #tpu.memory_space<smem>>, %arg2: memref<2xi32, #tpu.memory_space<smem>>, %arg3: memref<32x64xbf16, #tpu.memory_space<vmem>>, %arg4: memref<32x256xbf16, #tpu.memory_space<vmem>>, %arg5: memref<2048x32xbf16, #tpu.memory_space<vmem>>, %arg6: memref<1x64x2048xbf16, #tpu.memory_space<vmem>>, %arg7: memref<32x128xf32, #tpu.memory_space<vmem>>) attributes {dimension_semantics = [#tpu.dimension_semantics<parallel>], iteration_bounds = array<i64: 2>, scalar_prefetch = 1 : i64, scratch_operands = 0 : i64, tpu.core_type = #tpu.core_type<tc>, window_params = [{transform_indices = @transform_0, window_bounds = array<i64: 2>}, {transform_indices = @transform_1, window_bounds = array<i64: 32, 64>}, {transform_indices = @transform_2, window_bounds = array<i64: 32, 256>}, {pipeline_mode = #tpu.pipeline_mode<synchronous>, transform_indices = @transform_3, window_bounds = array<i64: 2048, 32>}, {transform_indices = @transform_4, window_bounds = array<i64: 1, 64, 2048>}, {transform_indices = @transform_5, window_bounds = array<i64: 32, 128>}]} {
    %0 = arith.index_cast %arg0 : i32 to index
    %1 = memref.load %arg2[%0] : memref<2xi32, #tpu.memory_space<smem>>
    %c0_i32 = arith.constant 0 : i32
    %2 = arith.cmpi eq, %1, %c0_i32 : i32
    %3 = arith.extui %2 : i1 to i32
    %c0_i32_0 = arith.constant 0 : i32
    %4 = arith.cmpi ne, %3, %c0_i32_0 : i32
    scf.if %4 {
      %cst = arith.constant 0.000000e+00 : f32
      %10 = vector.broadcast %cst : f32 to vector<32x128xf32>
      %c0 = arith.constant 0 : index
      %c0_3 = arith.constant 0 : index
      %11 = vector.load %arg7[%c0, %c0_3] : memref<32x128xf32, #tpu.memory_space<vmem>>, vector<32x128xf32>
      tpu.vector_store %arg7[%c0, %c0_3], %10 {strides = array<i32>} : memref<32x128xf32, #tpu.memory_space<vmem>>, vector<32x128xf32>,
    } else {
    }
    %5 = arith.index_cast %arg0 : i32 to index
    %6 = memref.load %arg2[%5] : memref<2xi32, #tpu.memory_space<smem>>
    %c0_i32_1 = arith.constant 0 : i32
    %7 = arith.cmpi ne, %6, %c0_i32_1 : i32
    %8 = arith.extui %7 : i1 to i32
    %c0_i32_2 = arith.constant 0 : i32
    %9 = arith.cmpi ne, %8, %c0_i32_2 : i32
    scf.if %9 {
      %c0 = arith.constant 0 : index
      %c0_3 = arith.constant 0 : index
      %10 = vector.load %arg3[%c0, %c0_3] : memref<32x64xbf16, #tpu.memory_space<vmem>>, vector<32x64xbf16>
      %c0_4 = arith.constant 0 : index
      %c0_5 = arith.constant 0 : index
      %11 = vector.load %arg4[%c0_4, %c0_5] : memref<32x256xbf16, #tpu.memory_space<vmem>>, vector<32x256xbf16>
      %c0_6 = arith.constant 0 : index
      %c0_7 = arith.constant 0 : index
      %12 = vector.load %arg5[%c0_6, %c0_7] : memref<2048x32xbf16, #tpu.memory_space<vmem>>, vector<2048x32xbf16>
      %c0_8 = arith.constant 0 : index
      %c0_9 = arith.constant 0 : index
      %c0_10 = arith.constant 0 : index
      %13 = vector.load %arg6[%c0_8, %c0_9, %c0_10] : memref<1x64x2048xbf16, #tpu.memory_space<vmem>>, vector<1x64x2048xbf16>
      %14 = vector.shape_cast %13 : vector<1x64x2048xbf16> to vector<64x2048xbf16>
      %15 = vector.extract_strided_slice %11 {offsets = [0, 0], sizes = [32, 64], strides = [1, 1]} : vector<32x256xbf16> to vector<32x64xbf16>
      %16 = tpu.concatenate %15, %15 in 1 : vector<32x64xbf16>, vector<32x64xbf16> -> vector<32x128xbf16>
      %17 = tpu.concatenate %16, %16 in 1 : vector<32x128xbf16>, vector<32x128xbf16> -> vector<32x256xbf16>
      %18 = tpu.concatenate %17, %17 in 1 : vector<32x256xbf16>, vector<32x256xbf16> -> vector<32x512xbf16>
      %19 = tpu.concatenate %18, %18 in 1 : vector<32x512xbf16>, vector<32x512xbf16> -> vector<32x1024xbf16>
      %20 = tpu.concatenate %19, %19 in 1 : vector<32x1024xbf16>, vector<32x1024xbf16> -> vector<32x2048xbf16>
      %21 = vector.extract_strided_slice %11 {offsets = [0, 64], sizes = [32, 64], strides = [1, 1]} : vector<32x256xbf16> to vector<32x64xbf16>
      %22 = tpu.concatenate %21, %21 in 1 : vector<32x64xbf16>, vector<32x64xbf16> -> vector<32x128xbf16>
      %23 = tpu.concatenate %22, %22 in 1 : vector<32x128xbf16>, vector<32x128xbf16> -> vector<32x256xbf16>
      %24 = tpu.concatenate %23, %23 in 1 : vector<32x256xbf16>, vector<32x256xbf16> -> vector<32x512xbf16>
      %25 = tpu.concatenate %24, %24 in 1 : vector<32x512xbf16>, vector<32x512xbf16> -> vector<32x1024xbf16>
      %26 = tpu.concatenate %25, %25 in 1 : vector<32x1024xbf16>, vector<32x1024xbf16> -> vector<32x2048xbf16>
      %27 = vector.extract_strided_slice %11 {offsets = [0, 128], sizes = [32, 64], strides = [1, 1]} : vector<32x256xbf16> to vector<32x64xbf16>
      %28 = tpu.concatenate %27, %27 in 1 : vector<32x64xbf16>, vector<32x64xbf16> -> vector<32x128xbf16>
      %29 = tpu.concatenate %28, %28 in 1 : vector<32x128xbf16>, vector<32x128xbf16> -> vector<32x256xbf16>
      %30 = tpu.concatenate %29, %29 in 1 : vector<32x256xbf16>, vector<32x256xbf16> -> vector<32x512xbf16>
      %31 = tpu.concatenate %30, %30 in 1 : vector<32x512xbf16>, vector<32x512xbf16> -> vector<32x1024xbf16>
      %32 = tpu.concatenate %31, %31 in 1 : vector<32x1024xbf16>, vector<32x1024xbf16> -> vector<32x2048xbf16>
      %33 = vector.extract_strided_slice %11 {offsets = [0, 192], sizes = [32, 64], strides = [1, 1]} : vector<32x256xbf16> to vector<32x64xbf16>
      %34 = tpu.concatenate %33, %33 in 1 : vector<32x64xbf16>, vector<32x64xbf16> -> vector<32x128xbf16>
      %35 = tpu.concatenate %34, %34 in 1 : vector<32x128xbf16>, vector<32x128xbf16> -> vector<32x256xbf16>
      %36 = tpu.concatenate %35, %35 in 1 : vector<32x256xbf16>, vector<32x256xbf16> -> vector<32x512xbf16>
      %37 = tpu.concatenate %36, %36 in 1 : vector<32x512xbf16>, vector<32x512xbf16> -> vector<32x1024xbf16>
      %38 = tpu.concatenate %37, %37 in 1 : vector<32x1024xbf16>, vector<32x1024xbf16> -> vector<32x2048xbf16>
      %cst = arith.constant dense<0.000000e+00> : vector<32x2048xf32>
      %39 = tpu.matmul %10, %14, %cst {dimension_numbers = #tpu.dot_dimension_numbers<[1], [0], [0], [1], [0, 0, 1, 1], [], []>} : vector<32x64xbf16>, vector<64x2048xbf16>, vector<32x2048xf32> -> vector<32x2048xf32>
      %40 = arith.truncf %39 : vector<32x2048xf32> to vector<32x2048xbf16>
      %41 = arith.mulf %40, %20 : vector<32x2048xbf16>
      %42 = arith.mulf %40, %26 : vector<32x2048xbf16>
      %43 = arith.mulf %40, %32 : vector<32x2048xbf16>
      %44 = arith.mulf %40, %38 : vector<32x2048xbf16>
      %45 = tpu.concatenate %41, %42, %43, %44 in 0 : vector<32x2048xbf16>, vector<32x2048xbf16>, vector<32x2048xbf16>, vector<32x2048xbf16> -> vector<128x2048xbf16>
      %cst_11 = arith.constant dense<0.000000e+00> : vector<128x32xf32>
      %46 = tpu.matmul %45, %12, %cst_11 {dimension_numbers = #tpu.dot_dimension_numbers<[1], [0], [0], [1], [0, 0, 1, 1], [], []>} : vector<128x2048xbf16>, vector<2048x32xbf16>, vector<128x32xf32> -> vector<128x32xf32>
      %47 = vector.extract_strided_slice %46 {offsets = [0, 0], sizes = [32, 32], strides = [1, 1]} : vector<128x32xf32> to vector<32x32xf32>
      %48 = vector.extract_strided_slice %46 {offsets = [32, 0], sizes = [32, 32], strides = [1, 1]} : vector<128x32xf32> to vector<32x32xf32>
      %49 = vector.extract_strided_slice %46 {offsets = [64, 0], sizes = [32, 32], strides = [1, 1]} : vector<128x32xf32> to vector<32x32xf32>
      %50 = vector.extract_strided_slice %46 {offsets = [96, 0], sizes = [32, 32], strides = [1, 1]} : vector<128x32xf32> to vector<32x32xf32>
      %51 = tpu.concatenate %47, %48, %49, %50 in 1 : vector<32x32xf32>, vector<32x32xf32>, vector<32x32xf32>, vector<32x32xf32> -> vector<32x128xf32>
      %c0_12 = arith.constant 0 : index
      %c0_13 = arith.constant 0 : index
      %52 = vector.load %arg7[%c0_12, %c0_13] : memref<32x128xf32, #tpu.memory_space<vmem>>, vector<32x128xf32>
      tpu.vector_store %arg7[%c0_12, %c0_13], %51 {strides = array<i32>} : memref<32x128xf32, #tpu.memory_space<vmem>>, vector<32x128xf32>,
    } else {
    }
    return
  }
  func.func @transform_0(%arg0: i32, %arg1: memref<2xi32, #tpu.memory_space<smem>>) -> i32 {
    %c0_i32 = arith.constant 0 : i32
    %c0_i32_0 = arith.constant 0 : i32
    return %c0_i32 : i32
  }
  func.func @transform_1(%arg0: i32, %arg1: memref<2xi32, #tpu.memory_space<smem>>) -> (i32, i32) {
    %c0_i32 = arith.constant 0 : i32
    %c0_i32_0 = arith.constant 0 : i32
    return %arg0, %c0_i32 : i32, i32
  }
  func.func @transform_2(%arg0: i32, %arg1: memref<2xi32, #tpu.memory_space<smem>>) -> (i32, i32) {
    %c0_i32 = arith.constant 0 : i32
    %c0_i32_0 = arith.constant 0 : i32
    return %arg0, %c0_i32 : i32, i32
  }
  func.func @transform_3(%arg0: i32, %arg1: memref<2xi32, #tpu.memory_space<smem>>) -> (i32, i32) {
    %c0_i32 = arith.constant 0 : i32
    %c0_i32_0 = arith.constant 0 : i32
    %c0_i32_1 = arith.constant 0 : i32
    return %c0_i32, %c0_i32_0 : i32, i32
  }
  func.func @transform_4(%arg0: i32, %arg1: memref<2xi32, #tpu.memory_space<smem>>) -> (i32, i32, i32) {
    %0 = arith.index_cast %arg0 : i32 to index
    %1 = memref.load %arg1[%0] : memref<2xi32, #tpu.memory_space<smem>>
    %c0_i32 = arith.constant 0 : i32
    %c0_i32_0 = arith.constant 0 : i32
    %c0_i32_1 = arith.constant 0 : i32
    return %1, %c0_i32, %c0_i32_0 : i32, i32, i32
  }
  func.func @transform_5(%arg0: i32, %arg1: memref<2xi32, #tpu.memory_space<smem>>) -> (i32, i32) {
    %c0_i32 = arith.constant 0 : i32
    %c0_i32_0 = arith.constant 0 : i32
    return %arg0, %c0_i32 : i32, i32
  }
}

</mosaic_0001>

<llo_original>
// kernel: tpu_custom_call.1
$region0: #{tpu_custom_call.1}
  #allocation0 [shape = 'u32[]', space=smem, size = 0x4, offset = 0x4, fixed_abs, tag = 'smem constant byte address 0x4 - core index']
  #allocation1 [shape = 'u32[144,128]{1,0:T(1,128)}', space=vmem, size = 0x12000, scoped, tag = 'internal scratch']
  #allocation2 [shape = 's32[1]{0}', space=sflag, size = 0x4, scoped, tag = 'scoped memory for tpu_custom_call.1']
  #allocation3 [shape = 'u8[512]{0}', space=smem, size = 0x200, scoped, tag = 'prefetched SMEM operand 0']
  %s0 = inlined_call_operand.vmem [shape: s32[2], index: 0, kind: input, shape index: {}]
  %s1 = inlined_call_operand.vmem [shape: s32[2], index: 1, kind: input, shape index: {}]
  %s2 = inlined_call_operand.vmem [shape: bf16[64,64], index: 2, kind: input, shape index: {}]
  %s3 = inlined_call_operand.vmem [shape: bf16[64,256], index: 3, kind: input, shape index: {}]
  %s4 = inlined_call_operand.vmem [shape: bf16[2048,32], index: 4, kind: input, shape index: {}]
  %s5 = inlined_call_operand.vmem [shape: bf16[2,64,2048], index: 5, kind: input, shape index: {}]
  %s6 = inlined_call_operand.hbm [shape: f32[64,128], index: 6, kind: output, shape index: {}]
  %s7 = sld [smem:[#allocation0]]
  $region65: #{tpu_custom_call.1} parent=0
    _
  %s9 = ssub.s32 1, %s7
  %s10 = scalar_select 0, %s9, %s7
  %s11 = sshll.u32 %s0, 4
  %s12 = int_to_ptr.vmem [resolvable:$true] %s11
  %14 = dma.vmem_to_smem %s12, 16, [#allocation3], [#allocation2]
  %15 = dma.done [#allocation2], 16
  %16 = sfence
  $region1: #{tpu_custom_call.1} parent=0
    #allocation4 [shape = 'u8[512]{0}', space=smem, size = 0x200, scoped, tag = 'input window, operand 1, single buffered']
    #allocation5 [shape = 's32[2]{0}', space=sflag, size = 0x8, scoped, tag = 'scoped memory for tpu_custom_call.1']
    #allocation6 [shape = 's32[2]{0}', space=sflag, size = 0x8, scoped, tag = 'scoped memory for tpu_custom_call.1']
    #allocation7 [shape = 'u8[32768]{0}', space=vmem, size = 0x8000, scoped, tag = 'output window, operand 0']
    %17 = vsyncpa [#allocation6], 0
    %18 = vsyncpa [#allocation5], 0
    %s19 = scalar_lea.sflag [#allocation5], 1
    %20 = vsyncpa %s19, 0
    loop: start=0, step=1, limit=4
    $region2: #{tpu_custom_call.1} parent=1 // loop_pre_header
      _
    $region3: #{tpu_custom_call.1} parent=1 // loop_header
      %s22 = sphi 0, %s26
      %p23 = scmp.ge.s32.totalorder %s22, 4
      %s30 = sphi 0, %s30
      %s32 = sphi 0, %s30
      %s33 = sphi 0, %s32
      %s47 = sphi 0, %s33
      %s53 = sphi 0, %s55
      %s56 = sphi 0, %s53
      %s57 = sphi 0, %s56
      %s73 = sphi 0, %s57
      %s79 = sphi 0, %s81
      %s82 = sphi 0, %s79
      %s83 = sphi 0, %s82
      %s99 = sphi 0, %s83
      %s103 = sphi 0, %s103
      %s105 = sphi 0, %s103
      %s106 = sphi 0, %s105
      %s120 = sphi 0, %s106
      %s128 = sphi 0, %s130
      %s131 = sphi 0, %s128
      %s132 = sphi 0, %s131
      %s148 = sphi 0, %s132
      %s154 = sphi 0, %s156
      %s157 = sphi 0, %s154
      %s158 = sphi 0, %s157
      %s174 = sphi 0, %s158
    $region4: #{tpu_custom_call.1} parent=1 // loop_header_branch
      %25 = sbr.rel (%p23) target = $region8
    $region5: #{tpu_custom_call.1} parent=1 // loop_body
      %s27 = ssub.s32 %s22, 1
      %s28 = ssub.s32 %s22, 2
      %s29 = sadd.s32 %s22, 1
      %s31 = sadd.s32 %s30, 1
      %p34 = scmp.eq.s32.totalorder %s22, 1
      %p35 = scmp.ne.s32.totalorder %s30, %s32
      %p36 = scmp.eq.s32.totalorder %s22, 0
      %p37 = por %p35, %p36
      %p38 = scmp.ne.s32.totalorder %s30, %s32
      %p39 = scmp.eq.s32.totalorder %s27, 1
      %p40 = por %p38, %p39
      %p41 = scmp.ne.s32.totalorder %s32, %s33
      %p42 = scmp.eq.s32.totalorder %s27, 0
      %p43 = por %p41, %p42
      %p44 = scmp.ne.s32.totalorder %s32, %s33
      %p45 = scmp.eq.s32.totalorder %s28, 1
      %p46 = por %p44, %p45
      %p48 = scmp.ne.s32.totalorder %s33, %s47
      %p49 = scmp.eq.s32.totalorder %s28, 0
      %p50 = por %p48, %p49
      %s51 = ssub.s32 %s22, %s29
      %p52 = scmp.eq.s32.totalorder %s51, 0
      %s54 = sadd.s32 %s53, 1
      %s55 = scalar_select %p52, %s53, %s54
      %p58 = pneg %p52
      %p59 = scmp.eq.s32.totalorder %s22, 1
      %p60 = por %p58, %p59
      %p61 = scmp.ne.s32.totalorder %s53, %s56
      %p62 = scmp.eq.s32.totalorder %s22, 0
      %p63 = por %p61, %p62
      %p64 = scmp.ne.s32.totalorder %s53, %s56
      %p65 = scmp.eq.s32.totalorder %s27, 1
      %p66 = por %p64, %p65
      %p67 = scmp.ne.s32.totalorder %s56, %s57
      %p68 = scmp.eq.s32.totalorder %s27, 0
      %p69 = por %p67, %p68
      %p70 = scmp.ne.s32.totalorder %s56, %s57
      %p71 = scmp.eq.s32.totalorder %s28, 1
      %p72 = por %p70, %p71
      %p74 = scmp.ne.s32.totalorder %s57, %s73
      %p75 = scmp.eq.s32.totalorder %s28, 0
      %p76 = por %p74, %p75
      %s77 = ssub.s32 %s22, %s29
      %p78 = scmp.eq.s32.totalorder %s77, 0
      %s80 = sadd.s32 %s79, 1
      %s81 = scalar_select %p78, %s79, %s80
      %p84 = pneg %p78
      %p85 = scmp.eq.s32.totalorder %s22, 1
      %p86 = por %p84, %p85
      %p87 = scmp.ne.s32.totalorder %s79, %s82
      %p88 = scmp.eq.s32.totalorder %s22, 0
      %p89 = por %p87, %p88
      %p90 = scmp.ne.s32.totalorder %s79, %s82
      %p91 = scmp.eq.s32.totalorder %s27, 1
      %p92 = por %p90, %p91
      %p93 = scmp.ne.s32.totalorder %s82, %s83
      %p94 = scmp.eq.s32.totalorder %s27, 0
      %p95 = por %p93, %p94
      %p96 = scmp.ne.s32.totalorder %s82, %s83
      %p97 = scmp.eq.s32.totalorder %s28, 1
      %p98 = por %p96, %p97
      %p100 = scmp.ne.s32.totalorder %s83, %s99
      %p101 = scmp.eq.s32.totalorder %s28, 0
      %p102 = por %p100, %p101
      %s104 = sadd.s32 %s103, 1
      %p107 = scmp.eq.s32.totalorder %s22, 1
      %p108 = scmp.ne.s32.totalorder %s103, %s105
      %p109 = scmp.eq.s32.totalorder %s22, 0
      %p110 = por %p108, %p109
      %p111 = scmp.ne.s32.totalorder %s103, %s105
      %p112 = scmp.eq.s32.totalorder %s27, 1
      %p113 = por %p111, %p112
      %p114 = scmp.ne.s32.totalorder %s105, %s106
      %p115 = scmp.eq.s32.totalorder %s27, 0
      %p116 = por %p114, %p115
      %p117 = scmp.ne.s32.totalorder %s105, %s106
      %p118 = scmp.eq.s32.totalorder %s28, 1
      %p119 = por %p117, %p118
      %p121 = scmp.ne.s32.totalorder %s106, %s120
      %p122 = scmp.eq.s32.totalorder %s28, 0
      %p123 = por %p121, %p122
      %s124 = sld [smem:[#allocation3 + %s22]]
      %s125 = sld [smem:[#allocation3 + %s29]]
      %s126 = ssub.s32 %s124, %s125
      %p127 = scmp.eq.s32.totalorder %s126, 0
      %s129 = sadd.s32 %s128, 1
      %s130 = scalar_select %p127, %s128, %s129
      %p133 = pneg %p127
      %p134 = scmp.eq.s32.totalorder %s22, 1
      %p135 = por %p133, %p134
      %p136 = scmp.ne.s32.totalorder %s128, %s131
      %p137 = scmp.eq.s32.totalorder %s22, 0
      %p138 = por %p136, %p137
      %p139 = scmp.ne.s32.totalorder %s128, %s131
      %p140 = scmp.eq.s32.totalorder %s27, 1
      %p141 = por %p139, %p140
      %p142 = scmp.ne.s32.totalorder %s131, %s132
      %p143 = scmp.eq.s32.totalorder %s27, 0
      %p144 = por %p142, %p143
      %p145 = scmp.ne.s32.totalorder %s131, %s132
      %p146 = scmp.eq.s32.totalorder %s28, 1
      %p147 = por %p145, %p146
      %p149 = scmp.ne.s32.totalorder %s132, %s148
      %p150 = scmp.eq.s32.totalorder %s28, 0
      %p151 = por %p149, %p150
      %s152 = ssub.s32 %s22, %s29
      %p153 = scmp.eq.s32.totalorder %s152, 0
      %s155 = sadd.s32 %s154, 1
      %s156 = scalar_select %p153, %s154, %s155
      %p159 = pneg %p153
      %p160 = scmp.eq.s32.totalorder %s22, 1
      %p161 = por %p159, %p160
      %p162 = scmp.ne.s32.totalorder %s154, %s157
      %p163 = scmp.eq.s32.totalorder %s22, 0
      %p164 = por %p162, %p163
      %p165 = scmp.ne.s32.totalorder %s154, %s157
      %p166 = scmp.eq.s32.totalorder %s27, 1
      %p167 = por %p165, %p166
      %p168 = scmp.ne.s32.totalorder %s157, %s158
      %p169 = scmp.eq.s32.totalorder %s27, 0
      %p170 = por %p168, %p169
      %p171 = scmp.ne.s32.totalorder %s157, %s158
      %p172 = scmp.eq.s32.totalorder %s28, 1
      %p173 = por %p171, %p172
      %p175 = scmp.ne.s32.totalorder %s158, %s174
      %p176 = scmp.eq.s32.totalorder %s28, 0
      %p177 = por %p175, %p176
      %p178 = scmp.le.s32.totalorder 1, %s22
      %p179 = scmp.lt.s32.totalorder %s22, 3
      %p180 = pnand %p178, %p179
      %p181 = pneg %p180
      // Predicated region
      $region9: #{tpu_custom_call.1} parent=5 // pred_check
        _
      $region10: #{tpu_custom_call.1} parent=5 // pred_check_branch
        %183 = sbr.rel (%p180) target = $region12
      $region11: #{tpu_custom_call.1} parent=5 // pred_region
        %s184 = ssub.s32 %s22, 1
        // Predicated region
        $region13: #{tpu_custom_call.1} parent=11 // pred_check
          %p185 = pneg %p43
        $region14: #{tpu_custom_call.1} parent=11 // pred_check_branch
          %187 = sbr.rel (%p185) target = $region16
        $region15: #{tpu_custom_call.1} parent=11 // pred_region
          %s189 = ssub.s32 16, 16
          %190 = vsyncadd [#allocation6], %s189
          %s192 = sshll.u32 %s1, 4
          %s193 = int_to_ptr.vmem [resolvable:$true] %s192
          %195 = dma.vmem_to_smem %s193, 16, [#allocation4], [#allocation6]
        $region16: #{tpu_custom_call.1} parent=11 // pred_fallthru
          _
        // Predicated region
        $region17: #{tpu_custom_call.1} parent=11 // pred_check
          %p196 = pneg %p116
        $region18: #{tpu_custom_call.1} parent=11 // pred_check_branch
          %198 = sbr.rel (%p196) target = $region20
        $region19: #{tpu_custom_call.1} parent=11 // pred_region
          _
        $region20: #{tpu_custom_call.1} parent=11 // pred_fallthru
          _
      $region12: #{tpu_custom_call.1} parent=5 // pred_fallthru
        _
      %p199 = scmp.lt.s32.totalorder %s22, 2
      // Predicated region
      $region21: #{tpu_custom_call.1} parent=5 // pred_check
        %p200 = pneg %p199
      $region22: #{tpu_custom_call.1} parent=5 // pred_check_branch
        %202 = sbr.rel (%p200) target = $region24
      $region23: #{tpu_custom_call.1} parent=5 // pred_region
        // Predicated region
        $region25: #{tpu_custom_call.1} parent=23 // pred_check
          %p203 = pneg %p63
        $region26: #{tpu_custom_call.1} parent=23 // pred_check_branch
          %205 = sbr.rel (%p203) target = $region28
        $region27: #{tpu_custom_call.1} parent=23 // pred_region
          %s206 = smul.u32 4, %s22
          %p207 = scmp.lt.s32.totalorder %s206, 7
          %s208 = scalar_select %p207, %s206, 7
          %s209 = smul.addr %s208, 4
          %s210 = scalar_lea.vmem %s2, %s209
          %s211 = smul.u32 4, %s22
        $region28: #{tpu_custom_call.1} parent=23 // pred_fallthru
          _
        // Predicated region
        $region29: #{tpu_custom_call.1} parent=23 // pred_check
          %p212 = pneg %p89
        $region30: #{tpu_custom_call.1} parent=23 // pred_check_branch
          %214 = sbr.rel (%p212) target = $region32
        $region31: #{tpu_custom_call.1} parent=23 // pred_region
          %s215 = smul.u32 4, %s22
          %p216 = scmp.lt.s32.totalorder %s215, 7
          %s217 = scalar_select %p216, %s215, 7
          %s218 = smul.addr %s217, 2
          %s219 = smul.addr %s218, 4
          %s220 = scalar_lea.vmem %s3, %s219
          %s221 = smul.u32 4, %s22
        $region32: #{tpu_custom_call.1} parent=23 // pred_fallthru
          _
        // Predicated region
        $region33: #{tpu_custom_call.1} parent=23 // pred_check
          %p222 = pneg %p138
        $region34: #{tpu_custom_call.1} parent=23 // pred_check_branch
          %224 = sbr.rel (%p222) target = $region36
        $region35: #{tpu_custom_call.1} parent=23 // pred_region
          %s225 = sld [smem:[#allocation3 + %s22]]
          %p226 = scmp.lt.s32.totalorder %s225, 1
          %s227 = scalar_select %p226, %s225, 1
          %s228 = smul.addr %s227, 128
          %s229 = smul.addr %s228, 4
          %s230 = scalar_lea.vmem %s5, %s229
          %s231 = sld [smem:[#allocation3 + %s22]]
        $region36: #{tpu_custom_call.1} parent=23 // pred_fallthru
          _
      $region24: #{tpu_custom_call.1} parent=5 // pred_fallthru
        _
      %p232 = scmp.le.s32.totalorder 1, %s22
      %p233 = scmp.lt.s32.totalorder %s22, 3
      %p234 = pnand %p232, %p233
      %p235 = pneg %p234
      // Predicated region
      $region37: #{tpu_custom_call.1} parent=5 // pred_check
        _
      $region38: #{tpu_custom_call.1} parent=5 // pred_check_branch
        %237 = sbr.rel (%p234) target = $region40
      $region39: #{tpu_custom_call.1} parent=5 // pred_region
        %s238 = ssub.s32 %s22, 1
        // Predicated region
        $region41: #{tpu_custom_call.1} parent=39 // pred_check
          %p239 = pneg %p43
        $region42: #{tpu_custom_call.1} parent=39 // pred_check_branch
          %241 = sbr.rel (%p239) target = $region44
        $region43: #{tpu_custom_call.1} parent=39 // pred_region
          %242 = dma.done [#allocation6], 16
        $region44: #{tpu_custom_call.1} parent=39 // pred_fallthru
          _
        %243 = sfence
        %p244 = pneg %p43
        %p245 = pneg %p40
        %s246 = smul.u32 4, %s27
        %p247 = scmp.lt.s32.totalorder %s246, 7
        %s248 = scalar_select %p247, %s246, 7
        %s249 = smul.addr %s248, 4
        %s250 = scalar_lea.vmem %s2, %s249
        %p251 = pneg %p69
        %p252 = pneg %p66
        %s253 = smul.u32 4, %s27
        %p254 = scmp.lt.s32.totalorder %s253, 7
        %s255 = scalar_select %p254, %s253, 7
        %s256 = smul.addr %s255, 2
        %s257 = smul.addr %s256, 4
        %s258 = scalar_lea.vmem %s3, %s257
        %p259 = pneg %p95
        %p260 = pneg %p92
        %p261 = pneg %p116
        %p262 = pneg %p113
        %s263 = sld [smem:[#allocation3 + %s27]]
        %p264 = scmp.lt.s32.totalorder %s263, 1
        %s265 = scalar_select %p264, %s263, 1
        %s266 = smul.addr %s265, 128
        %s267 = smul.addr %s266, 4
        %s268 = scalar_lea.vmem %s5, %s267
        %p269 = pneg %p144
        %p270 = pneg %p141
        %p271 = pneg %p170
        %p272 = pneg %p167
        %s273 = sand.u32 %s157, 1
        %s274 = scalar_lea.sflag [#allocation5], %s273
        %s275 = sand.u32 %s157, 1
        %s276 = smul.addr %s275, 32
        %s277 = scalar_lea.vmem [#allocation7], %s276
        %s278 = smul.u32 4, %s27
        %p279 = scmp.lt.s32.totalorder %s278, 7
        %s280 = scalar_select %p279, %s278, 7
        %s281 = smul.addr %s280, 4
        %s282 = scalar_lea.vmem %s2, %s281
        %s283 = smul.u32 4, %s27
        %s284 = smul.u32 4, %s27
        %p285 = scmp.lt.s32.totalorder %s284, 7
        %s286 = scalar_select %p285, %s284, 7
        %s287 = smul.addr %s286, 2
        %s288 = smul.addr %s287, 4
        %s289 = scalar_lea.vmem %s3, %s288
        %s290 = smul.u32 4, %s27
        %s291 = sld [smem:[#allocation3 + %s27]]
        %p292 = scmp.lt.s32.totalorder %s291, 1
        %s293 = scalar_select %p292, %s291, 1
        %s294 = smul.addr %s293, 128
        %s295 = smul.addr %s294, 4
        %s296 = scalar_lea.vmem %s5, %s295
        %s297 = sld [smem:[#allocation3 + %s27]]
        %s298 = smul.u32 4, %s27
        %s300 = sld [smem:[#allocation4 + %s27]]
        %p301 = scmp.eq.s32.totalorder %s300, 0
        // Predicated region
        $region45: #{tpu_custom_call.1} parent=39 // pred_check
          %p302 = pneg %p301
        $region46: #{tpu_custom_call.1} parent=39 // pred_check_branch
          %304 = sbr.rel (%p302) target = $region48
        $region47: #{tpu_custom_call.1} parent=39 // pred_region
          %305 = vst [vmem:[%s277] sm:$0xff] 0.0
          %306 = vst [vmem:[%s277 + $0x8] sm:$0xff] 0.0
          %307 = vst [vmem:[%s277 + $0x10] sm:$0xff] 0.0
          %308 = vst [vmem:[%s277 + $0x18] sm:$0xff] 0.0
        $region48: #{tpu_custom_call.1} parent=39 // pred_fallthru
          _
        %s309 = sld [smem:[#allocation4 + %s27]]
        %p310 = scmp.ne.s32.totalorder %s309, 0
        // Predicated region
        $region49: #{tpu_custom_call.1} parent=39 // pred_check
          %p311 = pneg %p310
        $region50: #{tpu_custom_call.1} parent=39 // pred_check_branch
          %313 = sbr.rel (%p311) target = $region52
        $region51: #{tpu_custom_call.1} parent=39 // pred_region
          %v314 = vld [vmem:[%s282] sm:$0xf]
          %v315 = vld [vmem:[%s282 + $0x4] sm:$0xf]
          %v316 = vld [vmem:[%s282 + $0x8] sm:$0xf]
          %v317 = vld [vmem:[%s282 + $0xc] sm:$0xf]
          %v318 = vld [vmem:[%s289] sm:$0xff]
          %v319 = vld [vmem:[%s289 + $0x8] sm:$0xff]
          %v320 = vld [vmem:[%s289 + $0x10] sm:$0xff]
          %v321 = vld [vmem:[%s289 + $0x18] sm:$0xff]
          %v322 = vld [vmem:[%s4] sm:$0xf]
          %v323 = vld [vmem:[%s4 + $0x4] sm:$0xf]
          %v324 = vld [vmem:[%s4 + $0x8] sm:$0xf]
          %v325 = vld [vmem:[%s4 + $0xc] sm:$0xf]
          %v326 = vld [vmem:[%s4 + $0x10] sm:$0xf]
          %v327 = vld [vmem:[%s4 + $0x14] sm:$0xf]
          %v328 = vld [vmem:[%s4 + $0x18] sm:$0xf]
          %v329 = vld [vmem:[%s4 + $0x1c] sm:$0xf]
          %v330 = vld [vmem:[%s4 + $0x20] sm:$0xf]
          %v331 = vld [vmem:[%s4 + $0x24] sm:$0xf]
          %v332 = vld [vmem:[%s4 + $0x28] sm:$0xf]
          %v333 = vld [vmem:[%s4 + $0x2c] sm:$0xf]
          %v334 = vld [vmem:[%s4 + $0x30] sm:$0xf]
          %v335 = vld [vmem:[%s4 + $0x34] sm:$0xf]
          %v336 = vld [vmem:[%s4 + $0x38] sm:$0xf]
          %v337 = vld [vmem:[%s4 + $0x3c] sm:$0xf]
          %v338 = vld [vmem:[%s4 + $0x40] sm:$0xf]
          %v339 = vld [vmem:[%s4 + $0x44] sm:$0xf]
          %v340 = vld [vmem:[%s4 + $0x48] sm:$0xf]
          %v341 = vld [vmem:[%s4 + $0x4c] sm:$0xf]
          %v342 = vld [vmem:[%s4 + $0x50] sm:$0xf]
          %v343 = vld [vmem:[%s4 + $0x54] sm:$0xf]
          %v344 = vld [vmem:[%s4 + $0x58] sm:$0xf]
          %v345 = vld [vmem:[%s4 + $0x5c] sm:$0xf]
          %v346 = vld [vmem:[%s4 + $0x60] sm:$0xf]
          %v347 = vld [vmem:[%s4 + $0x64] sm:$0xf]
          %v348 = vld [vmem:[%s4 + $0x68] sm:$0xf]
          %v349 = vld [vmem:[%s4 + $0x6c] sm:$0xf]
          %v350 = vld [vmem:[%s4 + $0x70] sm:$0xf]
          %v351 = vld [vmem:[%s4 + $0x74] sm:$0xf]
          %v352 = vld [vmem:[%s4 + $0x78] sm:$0xf]
          %v353 = vld [vmem:[%s4 + $0x7c] sm:$0xf]
          %v354 = vld [vmem:[%s4 + $0x80] sm:$0xf]
          %v355 = vld [vmem:[%s4 + $0x84] sm:$0xf]
          %v356 = vld [vmem:[%s4 + $0x88] sm:$0xf]
          %v357 = vld [vmem:[%s4 + $0x8c] sm:$0xf]
          %v358 = vld [vmem:[%s4 + $0x90] sm:$0xf]
          %v359 = vld [vmem:[%s4 + $0x94] sm:$0xf]
          %v360 = vld [vmem:[%s4 + $0x98] sm:$0xf]
          %v361 = vld [vmem:[%s4 + $0x9c] sm:$0xf]
          %v362 = vld [vmem:[%s4 + $0xa0] sm:$0xf]
          %v363 = vld [vmem:[%s4 + $0xa4] sm:$0xf]
          %v364 = vld [vmem:[%s4 + $0xa8] sm:$0xf]
          %v365 = vld [vmem:[%s4 + $0xac] sm:$0xf]
          %v366 = vld [vmem:[%s4 + $0xb0] sm:$0xf]
          %v367 = vld [vmem:[%s4 + $0xb4] sm:$0xf]
          %v368 = vld [vmem:[%s4 + $0xb8] sm:$0xf]
          %v369 = vld [vmem:[%s4 + $0xbc] sm:$0xf]
          %v370 = vld [vmem:[%s4 + $0xc0] sm:$0xf]
          %v371 = vld [vmem:[%s4 + $0xc4] sm:$0xf]
          %v372 = vld [vmem:[%s4 + $0xc8] sm:$0xf]
          %v373 = vld [vmem:[%s4 + $0xcc] sm:$0xf]
          %v374 = vld [vmem:[%s4 + $0xd0] sm:$0xf]
          %v375 = vld [vmem:[%s4 + $0xd4] sm:$0xf]
          %v376 = vld [vmem:[%s4 + $0xd8] sm:$0xf]
          %v377 = vld [vmem:[%s4 + $0xdc] sm:$0xf]
          %v378 = vld [vmem:[%s4 + $0xe0] sm:$0xf]
          %v379 = vld [vmem:[%s4 + $0xe4] sm:$0xf]
          %v380 = vld [vmem:[%s4 + $0xe8] sm:$0xf]
          %v381 = vld [vmem:[%s4 + $0xec] sm:$0xf]
          %v382 = vld [vmem:[%s4 + $0xf0] sm:$0xf]
          %v383 = vld [vmem:[%s4 + $0xf4] sm:$0xf]
          %v384 = vld [vmem:[%s4 + $0xf8] sm:$0xf]
          %v385 = vld [vmem:[%s4 + $0xfc] sm:$0xf]
          %v386 = vld [vmem:[%s4 + $0x100] sm:$0xf]
          %v387 = vld [vmem:[%s4 + $0x104] sm:$0xf]
          %v388 = vld [vmem:[%s4 + $0x108] sm:$0xf]
          %v389 = vld [vmem:[%s4 + $0x10c] sm:$0xf]
          %v390 = vld [vmem:[%s4 + $0x110] sm:$0xf]
          %v391 = vld [vmem:[%s4 + $0x114] sm:$0xf]
          %v392 = vld [vmem:[%s4 + $0x118] sm:$0xf]
          %v393 = vld [vmem:[%s4 + $0x11c] sm:$0xf]
          %v394 = vld [vmem:[%s4 + $0x120] sm:$0xf]
          %v395 = vld [vmem:[%s4 + $0x124] sm:$0xf]
          %v396 = vld [vmem:[%s4 + $0x128] sm:$0xf]
          %v397 = vld [vmem:[%s4 + $0x12c] sm:$0xf]
          %v398 = vld [vmem:[%s4 + $0x130] sm:$0xf]
          %v399 = vld [vmem:[%s4 + $0x134] sm:$0xf]
          %v400 = vld [vmem:[%s4 + $0x138] sm:$0xf]
          %v401 = vld [vmem:[%s4 + $0x13c] sm:$0xf]
          %v402 = vld [vmem:[%s4 + $0x140] sm:$0xf]
          %v403 = vld [vmem:[%s4 + $0x144] sm:$0xf]
          %v404 = vld [vmem:[%s4 + $0x148] sm:$0xf]
          %v405 = vld [vmem:[%s4 + $0x14c] sm:$0xf]
          %v406 = vld [vmem:[%s4 + $0x150] sm:$0xf]
          %v407 = vld [vmem:[%s4 + $0x154] sm:$0xf]
          %v408 = vld [vmem:[%s4 + $0x158] sm:$0xf]
          %v409 = vld [vmem:[%s4 + $0x15c] sm:$0xf]
          %v410 = vld [vmem:[%s4 + $0x160] sm:$0xf]
          %v411 = vld [vmem:[%s4 + $0x164] sm:$0xf]
          %v412 = vld [vmem:[%s4 + $0x168] sm:$0xf]
          %v413 = vld [vmem:[%s4 + $0x16c] sm:$0xf]
          %v414 = vld [vmem:[%s4 + $0x170] sm:$0xf]
          %v415 = vld [vmem:[%s4 + $0x174] sm:$0xf]
          %v416 = vld [vmem:[%s4 + $0x178] sm:$0xf]
          %v417 = vld [vmem:[%s4 + $0x17c] sm:$0xf]
          %v418 = vld [vmem:[%s4 + $0x180] sm:$0xf]
          %v419 = vld [vmem:[%s4 + $0x184] sm:$0xf]
          %v420 = vld [vmem:[%s4 + $0x188] sm:$0xf]
          %v421 = vld [vmem:[%s4 + $0x18c] sm:$0xf]
          %v422 = vld [vmem:[%s4 + $0x190] sm:$0xf]
          %v423 = vld [vmem:[%s4 + $0x194] sm:$0xf]
          %v424 = vld [vmem:[%s4 + $0x198] sm:$0xf]
          %v425 = vld [vmem:[%s4 + $0x19c] sm:$0xf]
          %v426 = vld [vmem:[%s4 + $0x1a0] sm:$0xf]
          %v427 = vld [vmem:[%s4 + $0x1a4] sm:$0xf]
          %v428 = vld [vmem:[%s4 + $0x1a8] sm:$0xf]
          %v429 = vld [vmem:[%s4 + $0x1ac] sm:$0xf]
          %v430 = vld [vmem:[%s4 + $0x1b0] sm:$0xf]
          %v431 = vld [vmem:[%s4 + $0x1b4] sm:$0xf]
          %v432 = vld [vmem:[%s4 + $0x1b8] sm:$0xf]
          %v433 = vld [vmem:[%s4 + $0x1bc] sm:$0xf]
          %v434 = vld [vmem:[%s4 + $0x1c0] sm:$0xf]
          %v435 = vld [vmem:[%s4 + $0x1c4] sm:$0xf]
          %v436 = vld [vmem:[%s4 + $0x1c8] sm:$0xf]
          %v437 = vld [vmem:[%s4 + $0x1cc] sm:$0xf]
          %v438 = vld [vmem:[%s4 + $0x1d0] sm:$0xf]
          %v439 = vld [vmem:[%s4 + $0x1d4] sm:$0xf]
          %v440 = vld [vmem:[%s4 + $0x1d8] sm:$0xf]
          %v441 = vld [vmem:[%s4 + $0x1dc] sm:$0xf]
          %v442 = vld [vmem:[%s4 + $0x1e0] sm:$0xf]
          %v443 = vld [vmem:[%s4 + $0x1e4] sm:$0xf]
          %v444 = vld [vmem:[%s4 + $0x1e8] sm:$0xf]
          %v445 = vld [vmem:[%s4 + $0x1ec] sm:$0xf]
          %v446 = vld [vmem:[%s4 + $0x1f0] sm:$0xf]
          %v447 = vld [vmem:[%s4 + $0x1f4] sm:$0xf]
          %v448 = vld [vmem:[%s4 + $0x1f8] sm:$0xf]
          %v449 = vld [vmem:[%s4 + $0x1fc] sm:$0xf]
          %v450 = vld [vmem:[%s4 + $0x200] sm:$0xf]
          %v451 = vld [vmem:[%s4 + $0x204] sm:$0xf]
          %v452 = vld [vmem:[%s4 + $0x208] sm:$0xf]
          %v453 = vld [vmem:[%s4 + $0x20c] sm:$0xf]
          %v454 = vld [vmem:[%s4 + $0x210] sm:$0xf]
          %v455 = vld [vmem:[%s4 + $0x214] sm:$0xf]
          %v456 = vld [vmem:[%s4 + $0x218] sm:$0xf]
          %v457 = vld [vmem:[%s4 + $0x21c] sm:$0xf]
          %v458 = vld [vmem:[%s4 + $0x220] sm:$0xf]
          %v459 = vld [vmem:[%s4 + $0x224] sm:$0xf]
          %v460 = vld [vmem:[%s4 + $0x228] sm:$0xf]
          %v461 = vld [vmem:[%s4 + $0x22c] sm:$0xf]
          %v462 = vld [vmem:[%s4 + $0x230] sm:$0xf]
          %v463 = vld [vmem:[%s4 + $0x234] sm:$0xf]
          %v464 = vld [vmem:[%s4 + $0x238] sm:$0xf]
          %v465 = vld [vmem:[%s4 + $0x23c] sm:$0xf]
          %v466 = vld [vmem:[%s4 + $0x240] sm:$0xf]
          %v467 = vld [vmem:[%s4 + $0x244] sm:$0xf]
          %v468 = vld [vmem:[%s4 + $0x248] sm:$0xf]
          %v469 = vld [vmem:[%s4 + $0x24c] sm:$0xf]
          %v470 = vld [vmem:[%s4 + $0x250] sm:$0xf]
          %v471 = vld [vmem:[%s4 + $0x254] sm:$0xf]
          %v472 = vld [vmem:[%s4 + $0x258] sm:$0xf]
          %v473 = vld [vmem:[%s4 + $0x25c] sm:$0xf]
          %v474 = vld [vmem:[%s4 + $0x260] sm:$0xf]
          %v475 = vld [vmem:[%s4 + $0x264] sm:$0xf]
          %v476 = vld [vmem:[%s4 + $0x268] sm:$0xf]
          %v477 = vld [vmem:[%s4 + $0x26c] sm:$0xf]
          %v478 = vld [vmem:[%s4 + $0x270] sm:$0xf]
          %v479 = vld [vmem:[%s4 + $0x274] sm:$0xf]
          %v480 = vld [vmem:[%s4 + $0x278] sm:$0xf]
          %v481 = vld [vmem:[%s4 + $0x27c] sm:$0xf]
          %v482 = vld [vmem:[%s4 + $0x280] sm:$0xf]
          %v483 = vld [vmem:[%s4 + $0x284] sm:$0xf]
          %v484 = vld [vmem:[%s4 + $0x288] sm:$0xf]
          %v485 = vld [vmem:[%s4 + $0x28c] sm:$0xf]
          %v486 = vld [vmem:[%s4 + $0x290] sm:$0xf]
          %v487 = vld [vmem:[%s4 + $0x294] sm:$0xf]
          %v488 = vld [vmem:[%s4 + $0x298] sm:$0xf]
          %v489 = vld [vmem:[%s4 + $0x29c] sm:$0xf]
          %v490 = vld [vmem:[%s4 + $0x2a0] sm:$0xf]
          %v491 = vld [vmem:[%s4 + $0x2a4] sm:$0xf]
          %v492 = vld [vmem:[%s4 + $0x2a8] sm:$0xf]
          %v493 = vld [vmem:[%s4 + $0x2ac] sm:$0xf]
          %v494 = vld [vmem:[%s4 + $0x2b0] sm:$0xf]
          %v495 = vld [vmem:[%s4 + $0x2b4] sm:$0xf]
          %v496 = vld [vmem:[%s4 + $0x2b8] sm:$0xf]
          %v497 = vld [vmem:[%s4 + $0x2bc] sm:$0xf]
          %v498 = vld [vmem:[%s4 + $0x2c0] sm:$0xf]
          %v499 = vld [vmem:[%s4 + $0x2c4] sm:$0xf]
          %v500 = vld [vmem:[%s4 + $0x2c8] sm:$0xf]
          %v501 = vld [vmem:[%s4 + $0x2cc] sm:$0xf]
          %v502 = vld [vmem:[%s4 + $0x2d0] sm:$0xf]
          %v503 = vld [vmem:[%s4 + $0x2d4] sm:$0xf]
          %v504 = vld [vmem:[%s4 + $0x2d8] sm:$0xf]
          %v505 = vld [vmem:[%s4 + $0x2dc] sm:$0xf]
          %v506 = vld [vmem:[%s4 + $0x2e0] sm:$0xf]
          %v507 = vld [vmem:[%s4 + $0x2e4] sm:$0xf]
          %v508 = vld [vmem:[%s4 + $0x2e8] sm:$0xf]
          %v509 = vld [vmem:[%s4 + $0x2ec] sm:$0xf]
          %v510 = vld [vmem:[%s4 + $0x2f0] sm:$0xf]
          %v511 = vld [vmem:[%s4 + $0x2f4] sm:$0xf]
          %v512 = vld [vmem:[%s4 + $0x2f8] sm:$0xf]
          %v513 = vld [vmem:[%s4 + $0x2fc] sm:$0xf]
          %v514 = vld [vmem:[%s4 + $0x300] sm:$0xf]
          %v515 = vld [vmem:[%s4 + $0x304] sm:$0xf]
          %v516 = vld [vmem:[%s4 + $0x308] sm:$0xf]
          %v517 = vld [vmem:[%s4 + $0x30c] sm:$0xf]
          %v518 = vld [vmem:[%s4 + $0x310] sm:$0xf]
          %v519 = vld [vmem:[%s4 + $0x314] sm:$0xf]
          %v520 = vld [vmem:[%s4 + $0x318] sm:$0xf]
          %v521 = vld [vmem:[%s4 + $0x31c] sm:$0xf]
          %v522 = vld [vmem:[%s4 + $0x320] sm:$0xf]
          %v523 = vld [vmem:[%s4 + $0x324] sm:$0xf]
          %v524 = vld [vmem:[%s4 + $0x328] sm:$0xf]
          %v525 = vld [vmem:[%s4 + $0x32c] sm:$0xf]
          %v526 = vld [vmem:[%s4 + $0x330] sm:$0xf]
          %v527 = vld [vmem:[%s4 + $0x334] sm:$0xf]
          %v528 = vld [vmem:[%s4 + $0x338] sm:$0xf]
          %v529 = vld [vmem:[%s4 + $0x33c] sm:$0xf]
          %v530 = vld [vmem:[%s4 + $0x340] sm:$0xf]
          %v531 = vld [vmem:[%s4 + $0x344] sm:$0xf]
          %v532 = vld [vmem:[%s4 + $0x348] sm:$0xf]
          %v533 = vld [vmem:[%s4 + $0x34c] sm:$0xf]
          %v534 = vld [vmem:[%s4 + $0x350] sm:$0xf]
          %v535 = vld [vmem:[%s4 + $0x354] sm:$0xf]
          %v536 = vld [vmem:[%s4 + $0x358] sm:$0xf]
          %v537 = vld [vmem:[%s4 + $0x35c] sm:$0xf]
          %v538 = vld [vmem:[%s4 + $0x360] sm:$0xf]
          %v539 = vld [vmem:[%s4 + $0x364] sm:$0xf]
          %v540 = vld [vmem:[%s4 + $0x368] sm:$0xf]
          %v541 = vld [vmem:[%s4 + $0x36c] sm:$0xf]
          %v542 = vld [vmem:[%s4 + $0x370] sm:$0xf]
          %v543 = vld [vmem:[%s4 + $0x374] sm:$0xf]
          %v544 = vld [vmem:[%s4 + $0x378] sm:$0xf]
          %v545 = vld [vmem:[%s4 + $0x37c] sm:$0xf]
          %v546 = vld [vmem:[%s4 + $0x380] sm:$0xf]
          %v547 = vld [vmem:[%s4 + $0x384] sm:$0xf]
          %v548 = vld [vmem:[%s4 + $0x388] sm:$0xf]
          %v549 = vld [vmem:[%s4 + $0x38c] sm:$0xf]
          %v550 = vld [vmem:[%s4 + $0x390] sm:$0xf]
          %v551 = vld [vmem:[%s4 + $0x394] sm:$0xf]
          %v552 = vld [vmem:[%s4 + $0x398] sm:$0xf]
          %v553 = vld [vmem:[%s4 + $0x39c] sm:$0xf]
          %v554 = vld [vmem:[%s4 + $0x3a0] sm:$0xf]
          %v555 = vld [vmem:[%s4 + $0x3a4] sm:$0xf]
          %v556 = vld [vmem:[%s4 + $0x3a8] sm:$0xf]
          %v557 = vld [vmem:[%s4 + $0x3ac] sm:$0xf]
          %v558 = vld [vmem:[%s4 + $0x3b0] sm:$0xf]
          %v559 = vld [vmem:[%s4 + $0x3b4] sm:$0xf]
          %v560 = vld [vmem:[%s4 + $0x3b8] sm:$0xf]
          %v561 = vld [vmem:[%s4 + $0x3bc] sm:$0xf]
          %v562 = vld [vmem:[%s4 + $0x3c0] sm:$0xf]
          %v563 = vld [vmem:[%s4 + $0x3c4] sm:$0xf]
          %v564 = vld [vmem:[%s4 + $0x3c8] sm:$0xf]
          %v565 = vld [vmem:[%s4 + $0x3cc] sm:$0xf]
          %v566 = vld [vmem:[%s4 + $0x3d0] sm:$0xf]
          %v567 = vld [vmem:[%s4 + $0x3d4] sm:$0xf]
          %v568 = vld [vmem:[%s4 + $0x3d8] sm:$0xf]
          %v569 = vld [vmem:[%s4 + $0x3dc] sm:$0xf]
          %v570 = vld [vmem:[%s4 + $0x3e0] sm:$0xf]
          %v571 = vld [vmem:[%s4 + $0x3e4] sm:$0xf]
          %v572 = vld [vmem:[%s4 + $0x3e8] sm:$0xf]
          %v573 = vld [vmem:[%s4 + $0x3ec] sm:$0xf]
          %v574 = vld [vmem:[%s4 + $0x3f0] sm:$0xf]
          %v575 = vld [vmem:[%s4 + $0x3f4] sm:$0xf]
          %v576 = vld [vmem:[%s4 + $0x3f8] sm:$0xf]
          %v577 = vld [vmem:[%s4 + $0x3fc] sm:$0xf]
          %v578 = vld [vmem:[%s296] sm:$0xff]
          %v579 = vld [vmem:[%s296 + $0x8] sm:$0xff]
          %v580 = vld [vmem:[%s296 + $0x10] sm:$0xff]
          %v581 = vld [vmem:[%s296 + $0x18] sm:$0xff]
          %v582 = vld [vmem:[%s296 + $0x20] sm:$0xff]
          %v583 = vld [vmem:[%s296 + $0x28] sm:$0xff]
          %v584 = vld [vmem:[%s296 + $0x30] sm:$0xff]
          %v585 = vld [vmem:[%s296 + $0x38] sm:$0xff]
          %v586 = vld [vmem:[%s296 + $0x40] sm:$0xff]
          %v587 = vld [vmem:[%s296 + $0x48] sm:$0xff]
          %v588 = vld [vmem:[%s296 + $0x50] sm:$0xff]
          %v589 = vld [vmem:[%s296 + $0x58] sm:$0xff]
          %v590 = vld [vmem:[%s296 + $0x60] sm:$0xff]
          %v591 = vld [vmem:[%s296 + $0x68] sm:$0xff]
          %v592 = vld [vmem:[%s296 + $0x70] sm:$0xff]
          %v593 = vld [vmem:[%s296 + $0x78] sm:$0xff]
          %v594 = vld [vmem:[%s296 + $0x80] sm:$0xff]
          %v595 = vld [vmem:[%s296 + $0x88] sm:$0xff]
          %v596 = vld [vmem:[%s296 + $0x90] sm:$0xff]
          %v597 = vld [vmem:[%s296 + $0x98] sm:$0xff]
          %v598 = vld [vmem:[%s296 + $0xa0] sm:$0xff]
          %v599 = vld [vmem:[%s296 + $0xa8] sm:$0xff]
          %v600 = vld [vmem:[%s296 + $0xb0] sm:$0xff]
          %v601 = vld [vmem:[%s296 + $0xb8] sm:$0xff]
          %v602 = vld [vmem:[%s296 + $0xc0] sm:$0xff]
          %v603 = vld [vmem:[%s296 + $0xc8] sm:$0xff]
          %v604 = vld [vmem:[%s296 + $0xd0] sm:$0xff]
          %v605 = vld [vmem:[%s296 + $0xd8] sm:$0xff]
          %v606 = vld [vmem:[%s296 + $0xe0] sm:$0xff]
          %v607 = vld [vmem:[%s296 + $0xe8] sm:$0xff]
          %v608 = vld [vmem:[%s296 + $0xf0] sm:$0xff]
          %v609 = vld [vmem:[%s296 + $0xf8] sm:$0xff]
          %v610 = vld [vmem:[%s296 + $0x100] sm:$0xff]
          %v611 = vld [vmem:[%s296 + $0x108] sm:$0xff]
          %v612 = vld [vmem:[%s296 + $0x110] sm:$0xff]
          %v613 = vld [vmem:[%s296 + $0x118] sm:$0xff]
          %v614 = vld [vmem:[%s296 + $0x120] sm:$0xff]
          %v615 = vld [vmem:[%s296 + $0x128] sm:$0xff]
          %v616 = vld [vmem:[%s296 + $0x130] sm:$0xff]
          %v617 = vld [vmem:[%s296 + $0x138] sm:$0xff]
          %v618 = vld [vmem:[%s296 + $0x140] sm:$0xff]
          %v619 = vld [vmem:[%s296 + $0x148] sm:$0xff]
          %v620 = vld [vmem:[%s296 + $0x150] sm:$0xff]
          %v621 = vld [vmem:[%s296 + $0x158] sm:$0xff]
          %v622 = vld [vmem:[%s296 + $0x160] sm:$0xff]
          %v623 = vld [vmem:[%s296 + $0x168] sm:$0xff]
          %v624 = vld [vmem:[%s296 + $0x170] sm:$0xff]
          %v625 = vld [vmem:[%s296 + $0x178] sm:$0xff]
          %v626 = vld [vmem:[%s296 + $0x180] sm:$0xff]
          %v627 = vld [vmem:[%s296 + $0x188] sm:$0xff]
          %v628 = vld [vmem:[%s296 + $0x190] sm:$0xff]
          %v629 = vld [vmem:[%s296 + $0x198] sm:$0xff]
          %v630 = vld [vmem:[%s296 + $0x1a0] sm:$0xff]
          %v631 = vld [vmem:[%s296 + $0x1a8] sm:$0xff]
          %v632 = vld [vmem:[%s296 + $0x1b0] sm:$0xff]
          %v633 = vld [vmem:[%s296 + $0x1b8] sm:$0xff]
          %v634 = vld [vmem:[%s296 + $0x1c0] sm:$0xff]
          %v635 = vld [vmem:[%s296 + $0x1c8] sm:$0xff]
          %v636 = vld [vmem:[%s296 + $0x1d0] sm:$0xff]
          %v637 = vld [vmem:[%s296 + $0x1d8] sm:$0xff]
          %v638 = vld [vmem:[%s296 + $0x1e0] sm:$0xff]
          %v639 = vld [vmem:[%s296 + $0x1e8] sm:$0xff]
          %v640 = vld [vmem:[%s296 + $0x1f0] sm:$0xff]
          %v641 = vld [vmem:[%s296 + $0x1f8] sm:$0xff]
          %v646 = vunpack.c.l.b16 %v318
          %v647 = vunpack.c.l.b16 %v319
          %v648 = vunpack.c.l.b16 %v320
          %v649 = vunpack.c.l.b16 %v321
          %v650 = vpack.c.b16 %v647, %v646
          %v651 = vpack.c.b16 %v649, %v648
          %652 = vrot.lane.b32.xlu0 %v650, 64
          %v653 = vpop.permute.xlu0 %652
          %654 = vrot.lane.b32.xlu0 %v651, 64
          %v655 = vpop.permute.xlu0 %654
          %vm656 = vcmask 523264
          %v659 = vsel %vm656, %v650, %v653
          %v663 = vsel %vm656, %v651, %v655
          %v665 = vsel %vm656, %v653, %v650
          %v667 = vsel %vm656, %v655, %v651
          %v669 = vunpack.c.h.b16 %v318
          %v670 = vunpack.c.h.b16 %v319
          %v671 = vunpack.c.h.b16 %v320
          %v672 = vunpack.c.h.b16 %v321
          %v673 = vpack.c.b16 %v670, %v669
          %v674 = vpack.c.b16 %v672, %v671
          %675 = vrot.lane.b32.xlu0 %v673, 64
          %v676 = vpop.permute.xlu0 %675
          %677 = vrot.lane.b32.xlu0 %v674, 64
          %v678 = vpop.permute.xlu0 %677
          %v681 = vsel %vm656, %v673, %v676
          %v685 = vsel %vm656, %v674, %v678
          %v687 = vsel %vm656, %v676, %v673
          %v689 = vsel %vm656, %v678, %v674
          %v695 = vunpack.c.l.b16 %v314
          %v696 = vunpack.c.l.b16 %v315
          %v697 = vunpack.c.l.b16 %v316
          %v698 = vunpack.c.l.b16 %v317
          %v699 = vpack.c.b16 %v696, %v695
          %v700 = vpack.c.b16 %v698, %v697
          %v765 = vunpack.c.l.b16 %v578
          %v766 = vunpack.c.h.b16 %v578
          %v767 = vunpack.c.l.b16 %v579
          %v768 = vunpack.c.h.b16 %v579
          %v769 = vunpack.c.l.b16 %v580
          %v770 = vunpack.c.h.b16 %v580
          %v771 = vunpack.c.l.b16 %v581
          %v772 = vunpack.c.h.b16 %v581
          %v773 = vunpack.c.l.b16 %v582
          %v774 = vunpack.c.h.b16 %v582
          %v775 = vunpack.c.l.b16 %v583
          %v776 = vunpack.c.h.b16 %v583
          %v777 = vunpack.c.l.b16 %v584
          %v778 = vunpack.c.h.b16 %v584
          %v779 = vunpack.c.l.b16 %v585
          %v780 = vunpack.c.h.b16 %v585
          %v781 = vunpack.c.l.b16 %v586
          %v782 = vunpack.c.h.b16 %v586
          %v783 = vunpack.c.l.b16 %v587
          %v784 = vunpack.c.h.b16 %v587
          %v785 = vunpack.c.l.b16 %v588
          %v786 = vunpack.c.h.b16 %v588
          %v787 = vunpack.c.l.b16 %v589
          %v788 = vunpack.c.h.b16 %v589
          %v789 = vunpack.c.l.b16 %v590
          %v790 = vunpack.c.h.b16 %v590
          %v791 = vunpack.c.l.b16 %v591
          %v792 = vunpack.c.h.b16 %v591
          %v793 = vunpack.c.l.b16 %v592
          %v794 = vunpack.c.h.b16 %v592
          %v795 = vunpack.c.l.b16 %v593
          %v796 = vunpack.c.h.b16 %v593
          %v797 = vunpack.c.l.b16 %v594
          %v798 = vunpack.c.h.b16 %v594
          %v799 = vunpack.c.l.b16 %v595
          %v800 = vunpack.c.h.b16 %v595
          %v801 = vunpack.c.l.b16 %v596
          %v802 = vunpack.c.h.b16 %v596
          %v803 = vunpack.c.l.b16 %v597
          %v804 = vunpack.c.h.b16 %v597
          %v805 = vunpack.c.l.b16 %v598
          %v806 = vunpack.c.h.b16 %v598
          %v807 = vunpack.c.l.b16 %v599
          %v808 = vunpack.c.h.b16 %v599
          %v809 = vunpack.c.l.b16 %v600
          %v810 = vunpack.c.h.b16 %v600
          %v811 = vunpack.c.l.b16 %v601
          %v812 = vunpack.c.h.b16 %v601
          %v813 = vunpack.c.l.b16 %v602
          %v814 = vunpack.c.h.b16 %v602
          %v815 = vunpack.c.l.b16 %v603
          %v816 = vunpack.c.h.b16 %v603
          %v817 = vunpack.c.l.b16 %v604
          %v818 = vunpack.c.h.b16 %v604
          %v819 = vunpack.c.l.b16 %v605
          %v820 = vunpack.c.h.b16 %v605
          %v821 = vunpack.c.l.b16 %v606
          %v822 = vunpack.c.h.b16 %v606
          %v823 = vunpack.c.l.b16 %v607
          %v824 = vunpack.c.h.b16 %v607
          %v825 = vunpack.c.l.b16 %v608
          %v826 = vunpack.c.h.b16 %v608
          %v827 = vunpack.c.l.b16 %v609
          %v828 = vunpack.c.h.b16 %v609
          %v829 = vunpack.c.l.b16 %v610
          %v830 = vunpack.c.h.b16 %v610
          %v831 = vunpack.c.l.b16 %v611
          %v832 = vunpack.c.h.b16 %v611
          %v833 = vunpack.c.l.b16 %v612
          %v834 = vunpack.c.h.b16 %v612
          %v835 = vunpack.c.l.b16 %v613
          %v836 = vunpack.c.h.b16 %v613
          %v837 = vunpack.c.l.b16 %v614
          %v838 = vunpack.c.h.b16 %v614
          %v839 = vunpack.c.l.b16 %v615
          %v840 = vunpack.c.h.b16 %v615
          %v841 = vunpack.c.l.b16 %v616
          %v842 = vunpack.c.h.b16 %v616
          %v843 = vunpack.c.l.b16 %v617
          %v844 = vunpack.c.h.b16 %v617
          %v845 = vunpack.c.l.b16 %v618
          %v846 = vunpack.c.h.b16 %v618
          %v847 = vunpack.c.l.b16 %v619
          %v848 = vunpack.c.h.b16 %v619
          %v849 = vunpack.c.l.b16 %v620
          %v850 = vunpack.c.h.b16 %v620
          %v851 = vunpack.c.l.b16 %v621
          %v852 = vunpack.c.h.b16 %v621
          %v853 = vunpack.c.l.b16 %v622
          %v854 = vunpack.c.h.b16 %v622
          %v855 = vunpack.c.l.b16 %v623
          %v856 = vunpack.c.h.b16 %v623
          %v857 = vunpack.c.l.b16 %v624
          %v858 = vunpack.c.h.b16 %v624
          %v859 = vunpack.c.l.b16 %v625
          %v860 = vunpack.c.h.b16 %v625
          %v861 = vunpack.c.l.b16 %v626
          %v862 = vunpack.c.h.b16 %v626
          %v863 = vunpack.c.l.b16 %v627
          %v864 = vunpack.c.h.b16 %v627
          %v865 = vunpack.c.l.b16 %v628
          %v866 = vunpack.c.h.b16 %v628
          %v867 = vunpack.c.l.b16 %v629
          %v868 = vunpack.c.h.b16 %v629
          %v869 = vunpack.c.l.b16 %v630
          %v870 = vunpack.c.h.b16 %v630
          %v871 = vunpack.c.l.b16 %v631
          %v872 = vunpack.c.h.b16 %v631
          %v873 = vunpack.c.l.b16 %v632
          %v874 = vunpack.c.h.b16 %v632
          %v875 = vunpack.c.l.b16 %v633
          %v876 = vunpack.c.h.b16 %v633
          %v877 = vunpack.c.l.b16 %v634
          %v878 = vunpack.c.h.b16 %v634
          %v879 = vunpack.c.l.b16 %v635
          %v880 = vunpack.c.h.b16 %v635
          %v881 = vunpack.c.l.b16 %v636
          %v882 = vunpack.c.h.b16 %v636
          %v883 = vunpack.c.l.b16 %v637
          %v884 = vunpack.c.h.b16 %v637
          %v885 = vunpack.c.l.b16 %v638
          %v886 = vunpack.c.h.b16 %v638
          %v887 = vunpack.c.l.b16 %v639
          %v888 = vunpack.c.h.b16 %v639
          %v889 = vunpack.c.l.b16 %v640
          %v890 = vunpack.c.h.b16 %v640
          %v891 = vunpack.c.l.b16 %v641
          %v892 = vunpack.c.h.b16 %v641
          %v893 = vpack.c.b16 %v781, %v765
          %v894 = vpack.c.b16 %v782, %v766
          %v895 = vpack.c.b16 %v783, %v767
          %v896 = vpack.c.b16 %v784, %v768
          %v897 = vpack.c.b16 %v785, %v769
          %v898 = vpack.c.b16 %v786, %v770
          %v899 = vpack.c.b16 %v787, %v771
          %v900 = vpack.c.b16 %v788, %v772
          %v901 = vpack.c.b16 %v789, %v773
          %v902 = vpack.c.b16 %v790, %v774
          %v903 = vpack.c.b16 %v791, %v775
          %v904 = vpack.c.b16 %v792, %v776
          %v905 = vpack.c.b16 %v793, %v777
          %v906 = vpack.c.b16 %v794, %v778
          %v907 = vpack.c.b16 %v795, %v779
          %v908 = vpack.c.b16 %v796, %v780
          %v909 = vpack.c.b16 %v813, %v797
          %v910 = vpack.c.b16 %v814, %v798
          %v911 = vpack.c.b16 %v815, %v799
          %v912 = vpack.c.b16 %v816, %v800
          %v913 = vpack.c.b16 %v817, %v801
          %v914 = vpack.c.b16 %v818, %v802
          %v915 = vpack.c.b16 %v819, %v803
          %v916 = vpack.c.b16 %v820, %v804
          %v917 = vpack.c.b16 %v821, %v805
          %v918 = vpack.c.b16 %v822, %v806
          %v919 = vpack.c.b16 %v823, %v807
          %v920 = vpack.c.b16 %v824, %v808
          %v921 = vpack.c.b16 %v825, %v809
          %v922 = vpack.c.b16 %v826, %v810
          %v923 = vpack.c.b16 %v827, %v811
          %v924 = vpack.c.b16 %v828, %v812
          %v925 = vpack.c.b16 %v845, %v829
          %v926 = vpack.c.b16 %v846, %v830
          %v927 = vpack.c.b16 %v847, %v831
          %v928 = vpack.c.b16 %v848, %v832
          %v929 = vpack.c.b16 %v849, %v833
          %v930 = vpack.c.b16 %v850, %v834
          %v931 = vpack.c.b16 %v851, %v835
          %v932 = vpack.c.b16 %v852, %v836
          %v933 = vpack.c.b16 %v853, %v837
          %v934 = vpack.c.b16 %v854, %v838
          %v935 = vpack.c.b16 %v855, %v839
          %v936 = vpack.c.b16 %v856, %v840
          %v937 = vpack.c.b16 %v857, %v841
          %v938 = vpack.c.b16 %v858, %v842
          %v939 = vpack.c.b16 %v859, %v843
          %v940 = vpack.c.b16 %v860, %v844
          %v941 = vpack.c.b16 %v877, %v861
          %v942 = vpack.c.b16 %v878, %v862
          %v943 = vpack.c.b16 %v879, %v863
          %v944 = vpack.c.b16 %v880, %v864
          %v945 = vpack.c.b16 %v881, %v865
          %v946 = vpack.c.b16 %v882, %v866
          %v947 = vpack.c.b16 %v883, %v867
          %v948 = vpack.c.b16 %v884, %v868
          %v949 = vpack.c.b16 %v885, %v869
          %v950 = vpack.c.b16 %v886, %v870
          %v951 = vpack.c.b16 %v887, %v871
          %v952 = vpack.c.b16 %v888, %v872
          %v953 = vpack.c.b16 %v889, %v873
          %v954 = vpack.c.b16 %v890, %v874
          %v955 = vpack.c.b16 %v891, %v875
          %v956 = vpack.c.b16 %v892, %v876
          %v1022 = vsel %vm656, %v699, 0
          %v1025 = vsel %vm656, %v700, 0
          %1027 = vmatprep.subr.bf16.mxu0 0
          %1028 = vmatpush1.bf16.msra.mxu0 0
          %1029 = vmatprep.subr.bf16.mxu0 0
          %1030 = vmatpush1.bf16.msra.mxu0 0
          %1031 = vmatprep.subr.bf16.mxu0 0
          %1032 = vmatpush1.bf16.msra.mxu0 0
          %1033 = vmatprep.subr.bf16.mxu0 0
          %1034 = vmatpush1.bf16.msra.mxu0 0
          %1035 = vmatprep.subr.bf16.mxu0 %v942
          %1036 = vmatpush1.bf16.msra.mxu0 %v941
          %1037 = vmatprep.subr.bf16.mxu0 %v926
          %1038 = vmatpush1.bf16.msra.mxu0 %v925
          %1039 = vmatprep.subr.bf16.mxu0 %v910
          %1040 = vmatpush1.bf16.msra.mxu0 %v909
          %1041 = vmatprep.subr.bf16.mxu0 %v894
          %1042 = vmatpush1.bf16.msra.mxu0 %v893
          %1043 = vmatprep.subr.bf16.mxu0 0
          %1044 = vmatpush2.bf16.msra.mxu0 0
          %1045 = vmatprep.subr.bf16.mxu0 0
          %1046 = vmatpush2.bf16.msra.mxu0 0
          %1047 = vmatprep.subr.bf16.mxu0 0
          %1048 = vmatpush2.bf16.msra.mxu0 0
          %1049 = vmatprep.subr.bf16.mxu0 0
          %1050 = vmatpush2.bf16.msra.mxu0 0
          %1051 = vmatprep.subr.bf16.mxu0 0
          %1052 = vmatpush2.bf16.msra.mxu0 0
          %1053 = vmatprep.subr.bf16.mxu0 0
          %1054 = vmatpush2.bf16.msra.mxu0 0
          %1055 = vmatprep.subr.bf16.mxu0 0
          %1056 = vmatpush2.bf16.msra.mxu0 0
          %1057 = vmatprep.subr.bf16.mxu0 0
          %1058 = vmatpush2.bf16.msra.mxu0 0
          %1059 = vmatprep.mubr.bf16.mxu0 0
          %1060 = vmatmul.mubr.bf16.gmra.mxu0 %v1022
          %v1061 = vpop.f32.mrf.mxu0
          %v1062 = vadd.f32 0.0, %v1061
          %v1063 = vpop.f32.mrf.mxu0
          %v1064 = vadd.f32 0.0, %v1063
          %v1065 = vpop.f32.mrf.mxu0
          %v1066 = vadd.f32 0.0, %v1065
          %v1067 = vpop.f32.mrf.mxu0
          %v1068 = vadd.f32 0.0, %v1067
          %1069 = vmatprep.mubr.bf16.mxu0 0
          %1070 = vmatmul.mubr.bf16.gmra.mxu0 %v1025
          %v1071 = vpop.f32.mrf.mxu0
          %v1072 = vadd.f32 0.0, %v1071
          %v1073 = vpop.f32.mrf.mxu0
          %v1074 = vadd.f32 0.0, %v1073
          %v1075 = vpop.f32.mrf.mxu0
          %v1076 = vadd.f32 0.0, %v1075
          %v1077 = vpop.f32.mrf.mxu0
          %v1078 = vadd.f32 0.0, %v1077
          %1079 = vdwg.mxu0
          %1080 = vmatprep.subr.bf16.mxu0 0
          %1081 = vmatpush1.bf16.msra.mxu0 0
          %1082 = vmatprep.subr.bf16.mxu0 0
          %1083 = vmatpush1.bf16.msra.mxu0 0
          %1084 = vmatprep.subr.bf16.mxu0 0
          %1085 = vmatpush1.bf16.msra.mxu0 0
          %1086 = vmatprep.subr.bf16.mxu0 0
          %1087 = vmatpush1.bf16.msra.mxu0 0
          %1088 = vmatprep.subr.bf16.mxu0 %v944
          %1089 = vmatpush1.bf16.msra.mxu0 %v943
          %1090 = vmatprep.subr.bf16.mxu0 %v928
          %1091 = vmatpush1.bf16.msra.mxu0 %v927
          %1092 = vmatprep.subr.bf16.mxu0 %v912
          %1093 = vmatpush1.bf16.msra.mxu0 %v911
          %1094 = vmatprep.subr.bf16.mxu0 %v896
          %1095 = vmatpush1.bf16.msra.mxu0 %v895
          %1096 = vmatprep.subr.bf16.mxu0 0
          %1097 = vmatpush2.bf16.msra.mxu0 0
          %1098 = vmatprep.subr.bf16.mxu0 0
          %1099 = vmatpush2.bf16.msra.mxu0 0
          %1100 = vmatprep.subr.bf16.mxu0 0
          %1101 = vmatpush2.bf16.msra.mxu0 0
          %1102 = vmatprep.subr.bf16.mxu0 0
          %1103 = vmatpush2.bf16.msra.mxu0 0
          %1104 = vmatprep.subr.bf16.mxu0 0
          %1105 = vmatpush2.bf16.msra.mxu0 0
          %1106 = vmatprep.subr.bf16.mxu0 0
          %1107 = vmatpush2.bf16.msra.mxu0 0
          %1108 = vmatprep.subr.bf16.mxu0 0
          %1109 = vmatpush2.bf16.msra.mxu0 0
          %1110 = vmatprep.subr.bf16.mxu0 0
          %1111 = vmatpush2.bf16.msra.mxu0 0
          %1112 = vmatprep.mubr.bf16.mxu0 0
          %1113 = vmatmul.mubr.bf16.gmra.mxu0 %v1022
          %v1114 = vpop.f32.mrf.mxu0
          %v1115 = vadd.f32 0.0, %v1114
          %v1116 = vpop.f32.mrf.mxu0
          %v1117 = vadd.f32 0.0, %v1116
          %v1118 = vpop.f32.mrf.mxu0
          %v1119 = vadd.f32 0.0, %v1118
          %v1120 = vpop.f32.mrf.mxu0
          %v1121 = vadd.f32 0.0, %v1120
          %1122 = vmatprep.mubr.bf16.mxu0 0
          %1123 = vmatmul.mubr.bf16.gmra.mxu0 %v1025
          %v1124 = vpop.f32.mrf.mxu0
          %v1125 = vadd.f32 0.0, %v1124
          %v1126 = vpop.f32.mrf.mxu0
          %v1127 = vadd.f32 0.0, %v1126
          %v1128 = vpop.f32.mrf.mxu0
          %v1129 = vadd.f32 0.0, %v1128
          %v1130 = vpop.f32.mrf.mxu0
          %v1131 = vadd.f32 0.0, %v1130
          %1132 = vdwg.mxu0
          %1133 = vmatprep.subr.bf16.mxu0 0
          %1134 = vmatpush1.bf16.msra.mxu0 0
          %1135 = vmatprep.subr.bf16.mxu0 0
          %1136 = vmatpush1.bf16.msra.mxu0 0
          %1137 = vmatprep.subr.bf16.mxu0 0
          %1138 = vmatpush1.bf16.msra.mxu0 0
          %1139 = vmatprep.subr.bf16.mxu0 0
          %1140 = vmatpush1.bf16.msra.mxu0 0
          %1141 = vmatprep.subr.bf16.mxu0 %v946
          %1142 = vmatpush1.bf16.msra.mxu0 %v945
          %1143 = vmatprep.subr.bf16.mxu0 %v930
          %1144 = vmatpush1.bf16.msra.mxu0 %v929
          %1145 = vmatprep.subr.bf16.mxu0 %v914
          %1146 = vmatpush1.bf16.msra.mxu0 %v913
          %1147 = vmatprep.subr.bf16.mxu0 %v898
          %1148 = vmatpush1.bf16.msra.mxu0 %v897
          %1149 = vmatprep.subr.bf16.mxu0 0
          %1150 = vmatpush2.bf16.msra.mxu0 0
          %1151 = vmatprep.subr.bf16.mxu0 0
          %1152 = vmatpush2.bf16.msra.mxu0 0
          %1153 = vmatprep.subr.bf16.mxu0 0
          %1154 = vmatpush2.bf16.msra.mxu0 0
          %1155 = vmatprep.subr.bf16.mxu0 0
          %1156 = vmatpush2.bf16.msra.mxu0 0
          %1157 = vmatprep.subr.bf16.mxu0 0
          %1158 = vmatpush2.bf16.msra.mxu0 0
          %1159 = vmatprep.subr.bf16.mxu0 0
          %1160 = vmatpush2.bf16.msra.mxu0 0
          %1161 = vmatprep.subr.bf16.mxu0 0
          %1162 = vmatpush2.bf16.msra.mxu0 0
          %1163 = vmatprep.subr.bf16.mxu0 0
          %1164 = vmatpush2.bf16.msra.mxu0 0
          %1165 = vmatprep.mubr.bf16.mxu0 0
          %1166 = vmatmul.mubr.bf16.gmra.mxu0 %v1022
          %v1167 = vpop.f32.mrf.mxu0
          %v1168 = vadd.f32 0.0, %v1167
          %v1169 = vpop.f32.mrf.mxu0
          %v1170 = vadd.f32 0.0, %v1169
          %v1171 = vpop.f32.mrf.mxu0
          %v1172 = vadd.f32 0.0, %v1171
          %v1173 = vpop.f32.mrf.mxu0
          %v1174 = vadd.f32 0.0, %v1173
          %1175 = vmatprep.mubr.bf16.mxu0 0
          %1176 = vmatmul.mubr.bf16.gmra.mxu0 %v1025
          %v1177 = vpop.f32.mrf.mxu0
          %v1178 = vadd.f32 0.0, %v1177
          %v1179 = vpop.f32.mrf.mxu0
          %v1180 = vadd.f32 0.0, %v1179
          %v1181 = vpop.f32.mrf.mxu0
          %v1182 = vadd.f32 0.0, %v1181
          %v1183 = vpop.f32.mrf.mxu0
          %v1184 = vadd.f32 0.0, %v1183
          %1185 = vdwg.mxu0
          %1186 = vmatprep.subr.bf16.mxu0 0
          %1187 = vmatpush1.bf16.msra.mxu0 0
          %1188 = vmatprep.subr.bf16.mxu0 0
          %1189 = vmatpush1.bf16.msra.mxu0 0
          %1190 = vmatprep.subr.bf16.mxu0 0
          %1191 = vmatpush1.bf16.msra.mxu0 0
          %1192 = vmatprep.subr.bf16.mxu0 0
          %1193 = vmatpush1.bf16.msra.mxu0 0
          %1194 = vmatprep.subr.bf16.mxu0 %v948
          %1195 = vmatpush1.bf16.msra.mxu0 %v947
          %1196 = vmatprep.subr.bf16.mxu0 %v932
          %1197 = vmatpush1.bf16.msra.mxu0 %v931
          %1198 = vmatprep.subr.bf16.mxu0 %v916
          %1199 = vmatpush1.bf16.msra.mxu0 %v915
          %1200 = vmatprep.subr.bf16.mxu0 %v900
          %1201 = vmatpush1.bf16.msra.mxu0 %v899
          %1202 = vmatprep.subr.bf16.mxu0 0
          %1203 = vmatpush2.bf16.msra.mxu0 0
          %1204 = vmatprep.subr.bf16.mxu0 0
          %1205 = vmatpush2.bf16.msra.mxu0 0
          %1206 = vmatprep.subr.bf16.mxu0 0
          %1207 = vmatpush2.bf16.msra.mxu0 0
          %1208 = vmatprep.subr.bf16.mxu0 0
          %1209 = vmatpush2.bf16.msra.mxu0 0
          %1210 = vmatprep.subr.bf16.mxu0 0
          %1211 = vmatpush2.bf16.msra.mxu0 0
          %1212 = vmatprep.subr.bf16.mxu0 0
          %1213 = vmatpush2.bf16.msra.mxu0 0
          %1214 = vmatprep.subr.bf16.mxu0 0
          %1215 = vmatpush2.bf16.msra.mxu0 0
          %1216 = vmatprep.subr.bf16.mxu0 0
          %1217 = vmatpush2.bf16.msra.mxu0 0
          %1218 = vmatprep.mubr.bf16.mxu0 0
          %1219 = vmatmul.mubr.bf16.gmra.mxu0 %v1022
          %v1220 = vpop.f32.mrf.mxu0
          %v1221 = vadd.f32 0.0, %v1220
          %v1222 = vpop.f32.mrf.mxu0
          %v1223 = vadd.f32 0.0, %v1222
          %v1224 = vpop.f32.mrf.mxu0
          %v1225 = vadd.f32 0.0, %v1224
          %v1226 = vpop.f32.mrf.mxu0
          %v1227 = vadd.f32 0.0, %v1226
          %1228 = vmatprep.mubr.bf16.mxu0 0
          %1229 = vmatmul.mubr.bf16.gmra.mxu0 %v1025
          %v1230 = vpop.f32.mrf.mxu0
          %v1231 = vadd.f32 0.0, %v1230
          %v1232 = vpop.f32.mrf.mxu0
          %v1233 = vadd.f32 0.0, %v1232
          %v1234 = vpop.f32.mrf.mxu0
          %v1235 = vadd.f32 0.0, %v1234
          %v1236 = vpop.f32.mrf.mxu0
          %v1237 = vadd.f32 0.0, %v1236
          %1238 = vdwg.mxu0
          %1239 = vmatprep.subr.bf16.mxu0 0
          %1240 = vmatpush1.bf16.msra.mxu0 0
          %1241 = vmatprep.subr.bf16.mxu0 0
          %1242 = vmatpush1.bf16.msra.mxu0 0
          %1243 = vmatprep.subr.bf16.mxu0 0
          %1244 = vmatpush1.bf16.msra.mxu0 0
          %1245 = vmatprep.subr.bf16.mxu0 0
          %1246 = vmatpush1.bf16.msra.mxu0 0
          %1247 = vmatprep.subr.bf16.mxu0 %v950
          %1248 = vmatpush1.bf16.msra.mxu0 %v949
          %1249 = vmatprep.subr.bf16.mxu0 %v934
          %1250 = vmatpush1.bf16.msra.mxu0 %v933
          %1251 = vmatprep.subr.bf16.mxu0 %v918
          %1252 = vmatpush1.bf16.msra.mxu0 %v917
          %1253 = vmatprep.subr.bf16.mxu0 %v902
          %1254 = vmatpush1.bf16.msra.mxu0 %v901
          %1255 = vmatprep.subr.bf16.mxu0 0
          %1256 = vmatpush2.bf16.msra.mxu0 0
          %1257 = vmatprep.subr.bf16.mxu0 0
          %1258 = vmatpush2.bf16.msra.mxu0 0
          %1259 = vmatprep.subr.bf16.mxu0 0
          %1260 = vmatpush2.bf16.msra.mxu0 0
          %1261 = vmatprep.subr.bf16.mxu0 0
          %1262 = vmatpush2.bf16.msra.mxu0 0
          %1263 = vmatprep.subr.bf16.mxu0 0
          %1264 = vmatpush2.bf16.msra.mxu0 0
          %1265 = vmatprep.subr.bf16.mxu0 0
          %1266 = vmatpush2.bf16.msra.mxu0 0
          %1267 = vmatprep.subr.bf16.mxu0 0
          %1268 = vmatpush2.bf16.msra.mxu0 0
          %1269 = vmatprep.subr.bf16.mxu0 0
          %1270 = vmatpush2.bf16.msra.mxu0 0
          %1271 = vmatprep.mubr.bf16.mxu0 0
          %1272 = vmatmul.mubr.bf16.gmra.mxu0 %v1022
          %v1273 = vpop.f32.mrf.mxu0
          %v1274 = vadd.f32 0.0, %v1273
          %v1275 = vpop.f32.mrf.mxu0
          %v1276 = vadd.f32 0.0, %v1275
          %v1277 = vpop.f32.mrf.mxu0
          %v1278 = vadd.f32 0.0, %v1277
          %v1279 = vpop.f32.mrf.mxu0
          %v1280 = vadd.f32 0.0, %v1279
          %1281 = vmatprep.mubr.bf16.mxu0 0
          %1282 = vmatmul.mubr.bf16.gmra.mxu0 %v1025
          %v1283 = vpop.f32.mrf.mxu0
          %v1284 = vadd.f32 0.0, %v1283
          %v1285 = vpop.f32.mrf.mxu0
          %v1286 = vadd.f32 0.0, %v1285
          %v1287 = vpop.f32.mrf.mxu0
          %v1288 = vadd.f32 0.0, %v1287
          %v1289 = vpop.f32.mrf.mxu0
          %v1290 = vadd.f32 0.0, %v1289
          %1291 = vdwg.mxu0
          %1292 = vmatprep.subr.bf16.mxu0 0
          %1293 = vmatpush1.bf16.msra.mxu0 0
          %1294 = vmatprep.subr.bf16.mxu0 0
          %1295 = vmatpush1.bf16.msra.mxu0 0
          %1296 = vmatprep.subr.bf16.mxu0 0
          %1297 = vmatpush1.bf16.msra.mxu0 0
          %1298 = vmatprep.subr.bf16.mxu0 0
          %1299 = vmatpush1.bf16.msra.mxu0 0
          %1300 = vmatprep.subr.bf16.mxu0 %v952
          %1301 = vmatpush1.bf16.msra.mxu0 %v951
          %1302 = vmatprep.subr.bf16.mxu0 %v936
          %1303 = vmatpush1.bf16.msra.mxu0 %v935
          %1304 = vmatprep.subr.bf16.mxu0 %v920
          %1305 = vmatpush1.bf16.msra.mxu0 %v919
          %1306 = vmatprep.subr.bf16.mxu0 %v904
          %1307 = vmatpush1.bf16.msra.mxu0 %v903
          %1308 = vmatprep.subr.bf16.mxu0 0
          %1309 = vmatpush2.bf16.msra.mxu0 0
          %1310 = vmatprep.subr.bf16.mxu0 0
          %1311 = vmatpush2.bf16.msra.mxu0 0
          %1312 = vmatprep.subr.bf16.mxu0 0
          %1313 = vmatpush2.bf16.msra.mxu0 0
          %1314 = vmatprep.subr.bf16.mxu0 0
          %1315 = vmatpush2.bf16.msra.mxu0 0
          %1316 = vmatprep.subr.bf16.mxu0 0
          %1317 = vmatpush2.bf16.msra.mxu0 0
          %1318 = vmatprep.subr.bf16.mxu0 0
          %1319 = vmatpush2.bf16.msra.mxu0 0
          %1320 = vmatprep.subr.bf16.mxu0 0
          %1321 = vmatpush2.bf16.msra.mxu0 0
          %1322 = vmatprep.subr.bf16.mxu0 0
          %1323 = vmatpush2.bf16.msra.mxu0 0
          %1324 = vmatprep.mubr.bf16.mxu0 0
          %1325 = vmatmul.mubr.bf16.gmra.mxu0 %v1022
          %v1326 = vpop.f32.mrf.mxu0
          %v1327 = vadd.f32 0.0, %v1326
          %v1328 = vpop.f32.mrf.mxu0
          %v1329 = vadd.f32 0.0, %v1328
          %v1330 = vpop.f32.mrf.mxu0
          %v1331 = vadd.f32 0.0, %v1330
          %v1332 = vpop.f32.mrf.mxu0
          %v1333 = vadd.f32 0.0, %v1332
          %1334 = vmatprep.mubr.bf16.mxu0 0
          %1335 = vmatmul.mubr.bf16.gmra.mxu0 %v1025
          %v1336 = vpop.f32.mrf.mxu0
          %v1337 = vadd.f32 0.0, %v1336
          %v1338 = vpop.f32.mrf.mxu0
          %v1339 = vadd.f32 0.0, %v1338
          %v1340 = vpop.f32.mrf.mxu0
          %v1341 = vadd.f32 0.0, %v1340
          %v1342 = vpop.f32.mrf.mxu0
          %v1343 = vadd.f32 0.0, %v1342
          %1344 = vdwg.mxu0
          %1345 = vmatprep.subr.bf16.mxu0 0
          %1346 = vmatpush1.bf16.msra.mxu0 0
          %1347 = vmatprep.subr.bf16.mxu0 0
          %1348 = vmatpush1.bf16.msra.mxu0 0
          %1349 = vmatprep.subr.bf16.mxu0 0
          %1350 = vmatpush1.bf16.msra.mxu0 0
          %1351 = vmatprep.subr.bf16.mxu0 0
          %1352 = vmatpush1.bf16.msra.mxu0 0
          %1353 = vmatprep.subr.bf16.mxu0 %v954
          %1354 = vmatpush1.bf16.msra.mxu0 %v953
          %1355 = vmatprep.subr.bf16.mxu0 %v938
          %1356 = vmatpush1.bf16.msra.mxu0 %v937
          %1357 = vmatprep.subr.bf16.mxu0 %v922
          %1358 = vmatpush1.bf16.msra.mxu0 %v921
          %1359 = vmatprep.subr.bf16.mxu0 %v906
          %1360 = vmatpush1.bf16.msra.mxu0 %v905
          %1361 = vmatprep.subr.bf16.mxu0 0
          %1362 = vmatpush2.bf16.msra.mxu0 0
          %1363 = vmatprep.subr.bf16.mxu0 0
          %1364 = vmatpush2.bf16.msra.mxu0 0
          %1365 = vmatprep.subr.bf16.mxu0 0
          %1366 = vmatpush2.bf16.msra.mxu0 0
          %1367 = vmatprep.subr.bf16.mxu0 0
          %1368 = vmatpush2.bf16.msra.mxu0 0
          %1369 = vmatprep.subr.bf16.mxu0 0
          %1370 = vmatpush2.bf16.msra.mxu0 0
          %1371 = vmatprep.subr.bf16.mxu0 0
          %1372 = vmatpush2.bf16.msra.mxu0 0
          %1373 = vmatprep.subr.bf16.mxu0 0
          %1374 = vmatpush2.bf16.msra.mxu0 0
          %1375 = vmatprep.subr.bf16.mxu0 0
          %1376 = vmatpush2.bf16.msra.mxu0 0
          %1377 = vmatprep.mubr.bf16.mxu0 0
          %1378 = vmatmul.mubr.bf16.gmra.mxu0 %v1022
          %v1379 = vpop.f32.mrf.mxu0
          %v1380 = vadd.f32 0.0, %v1379
          %v1381 = vpop.f32.mrf.mxu0
          %v1382 = vadd.f32 0.0, %v1381
          %v1383 = vpop.f32.mrf.mxu0
          %v1384 = vadd.f32 0.0, %v1383
          %v1385 = vpop.f32.mrf.mxu0
          %v1386 = vadd.f32 0.0, %v1385
          %1387 = vmatprep.mubr.bf16.mxu0 0
          %1388 = vmatmul.mubr.bf16.gmra.mxu0 %v1025
          %v1389 = vpop.f32.mrf.mxu0
          %v1390 = vadd.f32 0.0, %v1389
          %v1391 = vpop.f32.mrf.mxu0
          %v1392 = vadd.f32 0.0, %v1391
          %v1393 = vpop.f32.mrf.mxu0
          %v1394 = vadd.f32 0.0, %v1393
          %v1395 = vpop.f32.mrf.mxu0
          %v1396 = vadd.f32 0.0, %v1395
          %1397 = vdwg.mxu0
          %1398 = vmatprep.subr.bf16.mxu0 0
          %1399 = vmatpush1.bf16.msra.mxu0 0
          %1400 = vmatprep.subr.bf16.mxu0 0
          %1401 = vmatpush1.bf16.msra.mxu0 0
          %1402 = vmatprep.subr.bf16.mxu0 0
          %1403 = vmatpush1.bf16.msra.mxu0 0
          %1404 = vmatprep.subr.bf16.mxu0 0
          %1405 = vmatpush1.bf16.msra.mxu0 0
          %1406 = vmatprep.subr.bf16.mxu0 %v956
          %1407 = vmatpush1.bf16.msra.mxu0 %v955
          %1408 = vmatprep.subr.bf16.mxu0 %v940
          %1409 = vmatpush1.bf16.msra.mxu0 %v939
          %1410 = vmatprep.subr.bf16.mxu0 %v924
          %1411 = vmatpush1.bf16.msra.mxu0 %v923
          %1412 = vmatprep.subr.bf16.mxu0 %v908
          %1413 = vmatpush1.bf16.msra.mxu0 %v907
          %1414 = vmatprep.subr.bf16.mxu0 0
          %1415 = vmatpush2.bf16.msra.mxu0 0
          %1416 = vmatprep.subr.bf16.mxu0 0
          %1417 = vmatpush2.bf16.msra.mxu0 0
          %1418 = vmatprep.subr.bf16.mxu0 0
          %1419 = vmatpush2.bf16.msra.mxu0 0
          %1420 = vmatprep.subr.bf16.mxu0 0
          %1421 = vmatpush2.bf16.msra.mxu0 0
          %1422 = vmatprep.subr.bf16.mxu0 0
          %1423 = vmatpush2.bf16.msra.mxu0 0
          %1424 = vmatprep.subr.bf16.mxu0 0
          %1425 = vmatpush2.bf16.msra.mxu0 0
          %1426 = vmatprep.subr.bf16.mxu0 0
          %1427 = vmatpush2.bf16.msra.mxu0 0
          %1428 = vmatprep.subr.bf16.mxu0 0
          %1429 = vmatpush2.bf16.msra.mxu0 0
          %1430 = vmatprep.mubr.bf16.mxu0 0
          %1431 = vmatmul.mubr.bf16.gmra.mxu0 %v1022
          %v1432 = vpop.f32.mrf.mxu0
          %v1433 = vadd.f32 0.0, %v1432
          %v1434 = vpop.f32.mrf.mxu0
          %v1435 = vadd.f32 0.0, %v1434
          %v1436 = vpop.f32.mrf.mxu0
          %v1437 = vadd.f32 0.0, %v1436
          %v1438 = vpop.f32.mrf.mxu0
          %v1439 = vadd.f32 0.0, %v1438
          %1440 = vmatprep.mubr.bf16.mxu0 0
          %1441 = vmatmul.mubr.bf16.gmra.mxu0 %v1025
          %v1442 = vpop.f32.mrf.mxu0
          %v1443 = vadd.f32 0.0, %v1442
          %v1444 = vpop.f32.mrf.mxu0
          %v1445 = vadd.f32 0.0, %v1444
          %v1446 = vpop.f32.mrf.mxu0
          %v1447 = vadd.f32 0.0, %v1446
          %v1448 = vpop.f32.mrf.mxu0
          %v1449 = vadd.f32 0.0, %v1448
          %1450 = vdwg.mxu0
          %v1451 = vpack.c.bf16 %v1066, %v1062
          %v1452 = vpack.c.bf16 %v1068, %v1064
          %v1453 = vpack.c.bf16 %v1119, %v1115
          %v1454 = vpack.c.bf16 %v1121, %v1117
          %v1455 = vpack.c.bf16 %v1172, %v1168
          %v1456 = vpack.c.bf16 %v1174, %v1170
          %v1457 = vpack.c.bf16 %v1225, %v1221
          %v1458 = vpack.c.bf16 %v1227, %v1223
          %v1459 = vpack.c.bf16 %v1278, %v1274
          %v1460 = vpack.c.bf16 %v1280, %v1276
          %v1461 = vpack.c.bf16 %v1331, %v1327
          %v1462 = vpack.c.bf16 %v1333, %v1329
          %v1463 = vpack.c.bf16 %v1384, %v1380
          %v1464 = vpack.c.bf16 %v1386, %v1382
          %v1465 = vpack.c.bf16 %v1437, %v1433
          %v1466 = vpack.c.bf16 %v1439, %v1435
          %v1467 = vpack.c.bf16 %v1076, %v1072
          %v1468 = vpack.c.bf16 %v1078, %v1074
          %v1469 = vpack.c.bf16 %v1129, %v1125
          %v1470 = vpack.c.bf16 %v1131, %v1127
          %v1471 = vpack.c.bf16 %v1182, %v1178
          %v1472 = vpack.c.bf16 %v1184, %v1180
          %v1473 = vpack.c.bf16 %v1235, %v1231
          %v1474 = vpack.c.bf16 %v1237, %v1233
          %v1475 = vpack.c.bf16 %v1288, %v1284
          %v1476 = vpack.c.bf16 %v1290, %v1286
          %v1477 = vpack.c.bf16 %v1341, %v1337
          %v1478 = vpack.c.bf16 %v1343, %v1339
          %v1479 = vpack.c.bf16 %v1394, %v1390
          %v1480 = vpack.c.bf16 %v1396, %v1392
          %v1481 = vpack.c.bf16 %v1447, %v1443
          %v1482 = vpack.c.bf16 %v1449, %v1445
          %v1483 = vmul.bf16 %v1451, %v659
          %v1484 = vmul.bf16 %v1452, %v659
          %v1485 = vmul.bf16 %v1453, %v659
          %v1486 = vmul.bf16 %v1454, %v659
          %v1487 = vmul.bf16 %v1455, %v659
          %v1488 = vmul.bf16 %v1456, %v659
          %v1489 = vmul.bf16 %v1457, %v659
          %v1490 = vmul.bf16 %v1458, %v659
          %v1491 = vmul.bf16 %v1459, %v659
          %v1492 = vmul.bf16 %v1460, %v659
          %v1493 = vmul.bf16 %v1461, %v659
          %v1494 = vmul.bf16 %v1462, %v659
          %v1495 = vmul.bf16 %v1463, %v659
          %v1496 = vmul.bf16 %v1464, %v659
          %v1497 = vmul.bf16 %v1465, %v659
          %v1498 = vmul.bf16 %v1466, %v659
          %v1499 = vmul.bf16 %v1467, %v663
          %v1500 = vmul.bf16 %v1468, %v663
          %v1501 = vmul.bf16 %v1469, %v663
          %v1502 = vmul.bf16 %v1470, %v663
          %v1503 = vmul.bf16 %v1471, %v663
          %v1504 = vmul.bf16 %v1472, %v663
          %v1505 = vmul.bf16 %v1473, %v663
          %v1506 = vmul.bf16 %v1474, %v663
          %v1507 = vmul.bf16 %v1475, %v663
          %v1508 = vmul.bf16 %v1476, %v663
          %v1509 = vmul.bf16 %v1477, %v663
          %v1510 = vmul.bf16 %v1478, %v663
          %v1511 = vmul.bf16 %v1479, %v663
          %v1512 = vmul.bf16 %v1480, %v663
          %v1513 = vmul.bf16 %v1481, %v663
          %v1514 = vmul.bf16 %v1482, %v663
          %v1515 = vmul.bf16 %v1451, %v665
          %v1516 = vmul.bf16 %v1452, %v665
          %v1517 = vmul.bf16 %v1453, %v665
          %v1518 = vmul.bf16 %v1454, %v665
          %v1519 = vmul.bf16 %v1455, %v665
          %v1520 = vmul.bf16 %v1456, %v665
          %v1521 = vmul.bf16 %v1457, %v665
          %v1522 = vmul.bf16 %v1458, %v665
          %v1523 = vmul.bf16 %v1459, %v665
          %v1524 = vmul.bf16 %v1460, %v665
          %v1525 = vmul.bf16 %v1461, %v665
          %v1526 = vmul.bf16 %v1462, %v665
          %v1527 = vmul.bf16 %v1463, %v665
          %v1528 = vmul.bf16 %v1464, %v665
          %v1529 = vmul.bf16 %v1465, %v665
          %v1530 = vmul.bf16 %v1466, %v665
          %v1531 = vmul.bf16 %v1467, %v667
          %v1532 = vmul.bf16 %v1468, %v667
          %v1533 = vmul.bf16 %v1469, %v667
          %v1534 = vmul.bf16 %v1470, %v667
          %v1535 = vmul.bf16 %v1471, %v667
          %v1536 = vmul.bf16 %v1472, %v667
          %v1537 = vmul.bf16 %v1473, %v667
          %v1538 = vmul.bf16 %v1474, %v667
          %v1539 = vmul.bf16 %v1475, %v667
          %v1540 = vmul.bf16 %v1476, %v667
          %v1541 = vmul.bf16 %v1477, %v667
          %v1542 = vmul.bf16 %v1478, %v667
          %v1543 = vmul.bf16 %v1479, %v667
          %v1544 = vmul.bf16 %v1480, %v667
          %v1545 = vmul.bf16 %v1481, %v667
          %v1546 = vmul.bf16 %v1482, %v667
          %v1547 = vmul.bf16 %v1451, %v681
          %v1548 = vmul.bf16 %v1452, %v681
          %v1549 = vmul.bf16 %v1453, %v681
          %v1550 = vmul.bf16 %v1454, %v681
          %v1551 = vmul.bf16 %v1455, %v681
          %v1552 = vmul.bf16 %v1456, %v681
          %v1553 = vmul.bf16 %v1457, %v681
          %v1554 = vmul.bf16 %v1458, %v681
          %v1555 = vmul.bf16 %v1459, %v681
          %v1556 = vmul.bf16 %v1460, %v681
          %v1557 = vmul.bf16 %v1461, %v681
          %v1558 = vmul.bf16 %v1462, %v681
          %v1559 = vmul.bf16 %v1463, %v681
          %v1560 = vmul.bf16 %v1464, %v681
          %v1561 = vmul.bf16 %v1465, %v681
          %v1562 = vmul.bf16 %v1466, %v681
          %v1563 = vmul.bf16 %v1467, %v685
          %v1564 = vmul.bf16 %v1468, %v685
          %v1565 = vmul.bf16 %v1469, %v685
          %v1566 = vmul.bf16 %v1470, %v685
          %v1567 = vmul.bf16 %v1471, %v685
          %v1568 = vmul.bf16 %v1472, %v685
          %v1569 = vmul.bf16 %v1473, %v685
          %v1570 = vmul.bf16 %v1474, %v685
          %v1571 = vmul.bf16 %v1475, %v685
          %v1572 = vmul.bf16 %v1476, %v685
          %v1573 = vmul.bf16 %v1477, %v685
          %v1574 = vmul.bf16 %v1478, %v685
          %v1575 = vmul.bf16 %v1479, %v685
          %v1576 = vmul.bf16 %v1480, %v685
          %v1577 = vmul.bf16 %v1481, %v685
          %v1578 = vmul.bf16 %v1482, %v685
          %v1579 = vmul.bf16 %v1451, %v687
          %v1580 = vmul.bf16 %v1452, %v687
          %v1581 = vmul.bf16 %v1453, %v687
          %v1582 = vmul.bf16 %v1454, %v687
          %v1583 = vmul.bf16 %v1455, %v687
          %v1584 = vmul.bf16 %v1456, %v687
          %v1585 = vmul.bf16 %v1457, %v687
          %v1586 = vmul.bf16 %v1458, %v687
          %v1587 = vmul.bf16 %v1459, %v687
          %v1588 = vmul.bf16 %v1460, %v687
          %v1589 = vmul.bf16 %v1461, %v687
          %v1590 = vmul.bf16 %v1462, %v687
          %v1591 = vmul.bf16 %v1463, %v687
          %v1592 = vmul.bf16 %v1464, %v687
          %v1593 = vmul.bf16 %v1465, %v687
          %v1594 = vmul.bf16 %v1466, %v687
          %v1595 = vmul.bf16 %v1467, %v689
          %v1596 = vmul.bf16 %v1468, %v689
          %v1597 = vmul.bf16 %v1469, %v689
          %v1598 = vmul.bf16 %v1470, %v689
          %v1599 = vmul.bf16 %v1471, %v689
          %v1600 = vmul.bf16 %v1472, %v689
          %v1601 = vmul.bf16 %v1473, %v689
          %v1602 = vmul.bf16 %v1474, %v689
          %v1603 = vmul.bf16 %v1475, %v689
          %v1604 = vmul.bf16 %v1476, %v689
          %v1605 = vmul.bf16 %v1477, %v689
          %v1606 = vmul.bf16 %v1478, %v689
          %v1607 = vmul.bf16 %v1479, %v689
          %v1608 = vmul.bf16 %v1480, %v689
          %v1609 = vmul.bf16 %v1481, %v689
          %v1610 = vmul.bf16 %v1482, %v689
          %v1867 = vunpack.c.l.b16 %v322
          %v1868 = vunpack.c.l.b16 %v323
          %v1869 = vunpack.c.l.b16 %v324
          %v1870 = vunpack.c.l.b16 %v325
          %v1871 = vunpack.c.l.b16 %v326
          %v1872 = vunpack.c.l.b16 %v327
          %v1873 = vunpack.c.l.b16 %v328
          %v1874 = vunpack.c.l.b16 %v329
          %v1875 = vunpack.c.l.b16 %v330
          %v1876 = vunpack.c.l.b16 %v331
          %v1877 = vunpack.c.l.b16 %v332
          %v1878 = vunpack.c.l.b16 %v333
          %v1879 = vunpack.c.l.b16 %v334
          %v1880 = vunpack.c.l.b16 %v335
          %v1881 = vunpack.c.l.b16 %v336
          %v1882 = vunpack.c.l.b16 %v337
          %v1883 = vunpack.c.l.b16 %v338
          %v1884 = vunpack.c.l.b16 %v339
          %v1885 = vunpack.c.l.b16 %v340
          %v1886 = vunpack.c.l.b16 %v341
          %v1887 = vunpack.c.l.b16 %v342
          %v1888 = vunpack.c.l.b16 %v343
          %v1889 = vunpack.c.l.b16 %v344
          %v1890 = vunpack.c.l.b16 %v345
          %v1891 = vunpack.c.l.b16 %v346
          %v1892 = vunpack.c.l.b16 %v347
          %v1893 = vunpack.c.l.b16 %v348
          %v1894 = vunpack.c.l.b16 %v349
          %v1895 = vunpack.c.l.b16 %v350
          %v1896 = vunpack.c.l.b16 %v351
          %v1897 = vunpack.c.l.b16 %v352
          %v1898 = vunpack.c.l.b16 %v353
          %v1899 = vunpack.c.l.b16 %v354
          %v1900 = vunpack.c.l.b16 %v355
          %v1901 = vunpack.c.l.b16 %v356
          %v1902 = vunpack.c.l.b16 %v357
          %v1903 = vunpack.c.l.b16 %v358
          %v1904 = vunpack.c.l.b16 %v359
          %v1905 = vunpack.c.l.b16 %v360
          %v1906 = vunpack.c.l.b16 %v361
          %v1907 = vunpack.c.l.b16 %v362
          %v1908 = vunpack.c.l.b16 %v363
          %v1909 = vunpack.c.l.b16 %v364
          %v1910 = vunpack.c.l.b16 %v365
          %v1911 = vunpack.c.l.b16 %v366
          %v1912 = vunpack.c.l.b16 %v367
          %v1913 = vunpack.c.l.b16 %v368
          %v1914 = vunpack.c.l.b16 %v369
          %v1915 = vunpack.c.l.b16 %v370
          %v1916 = vunpack.c.l.b16 %v371
          %v1917 = vunpack.c.l.b16 %v372
          %v1918 = vunpack.c.l.b16 %v373
          %v1919 = vunpack.c.l.b16 %v374
          %v1920 = vunpack.c.l.b16 %v375
          %v1921 = vunpack.c.l.b16 %v376
          %v1922 = vunpack.c.l.b16 %v377
          %v1923 = vunpack.c.l.b16 %v378
          %v1924 = vunpack.c.l.b16 %v379
          %v1925 = vunpack.c.l.b16 %v380
          %v1926 = vunpack.c.l.b16 %v381
          %v1927 = vunpack.c.l.b16 %v382
          %v1928 = vunpack.c.l.b16 %v383
          %v1929 = vunpack.c.l.b16 %v384
          %v1930 = vunpack.c.l.b16 %v385
          %v1931 = vunpack.c.l.b16 %v386
          %v1932 = vunpack.c.l.b16 %v387
          %v1933 = vunpack.c.l.b16 %v388
          %v1934 = vunpack.c.l.b16 %v389
          %v1935 = vunpack.c.l.b16 %v390
          %v1936 = vunpack.c.l.b16 %v391
          %v1937 = vunpack.c.l.b16 %v392
          %v1938 = vunpack.c.l.b16 %v393
          %v1939 = vunpack.c.l.b16 %v394
          %v1940 = vunpack.c.l.b16 %v395
          %v1941 = vunpack.c.l.b16 %v396
          %v1942 = vunpack.c.l.b16 %v397
          %v1943 = vunpack.c.l.b16 %v398
          %v1944 = vunpack.c.l.b16 %v399
          %v1945 = vunpack.c.l.b16 %v400
          %v1946 = vunpack.c.l.b16 %v401
          %v1947 = vunpack.c.l.b16 %v402
          %v1948 = vunpack.c.l.b16 %v403
          %v1949 = vunpack.c.l.b16 %v404
          %v1950 = vunpack.c.l.b16 %v405
          %v1951 = vunpack.c.l.b16 %v406
          %v1952 = vunpack.c.l.b16 %v407
          %v1953 = vunpack.c.l.b16 %v408
          %v1954 = vunpack.c.l.b16 %v409
          %v1955 = vunpack.c.l.b16 %v410
          %v1956 = vunpack.c.l.b16 %v411
          %v1957 = vunpack.c.l.b16 %v412
          %v1958 = vunpack.c.l.b16 %v413
          %v1959 = vunpack.c.l.b16 %v414
          %v1960 = vunpack.c.l.b16 %v415
          %v1961 = vunpack.c.l.b16 %v416
          %v1962 = vunpack.c.l.b16 %v417
          %v1963 = vunpack.c.l.b16 %v418
          %v1964 = vunpack.c.l.b16 %v419
          %v1965 = vunpack.c.l.b16 %v420
          %v1966 = vunpack.c.l.b16 %v421
          %v1967 = vunpack.c.l.b16 %v422
          %v1968 = vunpack.c.l.b16 %v423
          %v1969 = vunpack.c.l.b16 %v424
          %v1970 = vunpack.c.l.b16 %v425
          %v1971 = vunpack.c.l.b16 %v426
          %v1972 = vunpack.c.l.b16 %v427
          %v1973 = vunpack.c.l.b16 %v428
          %v1974 = vunpack.c.l.b16 %v429
          %v1975 = vunpack.c.l.b16 %v430
          %v1976 = vunpack.c.l.b16 %v431
          %v1977 = vunpack.c.l.b16 %v432
          %v1978 = vunpack.c.l.b16 %v433
          %v1979 = vunpack.c.l.b16 %v434
          %v1980 = vunpack.c.l.b16 %v435
          %v1981 = vunpack.c.l.b16 %v436
          %v1982 = vunpack.c.l.b16 %v437
          %v1983 = vunpack.c.l.b16 %v438
          %v1984 = vunpack.c.l.b16 %v439
          %v1985 = vunpack.c.l.b16 %v440
          %v1986 = vunpack.c.l.b16 %v441
          %v1987 = vunpack.c.l.b16 %v442
          %v1988 = vunpack.c.l.b16 %v443
          %v1989 = vunpack.c.l.b16 %v444
          %v1990 = vunpack.c.l.b16 %v445
          %v1991 = vunpack.c.l.b16 %v446
          %v1992 = vunpack.c.l.b16 %v447
          %v1993 = vunpack.c.l.b16 %v448
          %v1994 = vunpack.c.l.b16 %v449
          %v1995 = vunpack.c.l.b16 %v450
          %v1996 = vunpack.c.l.b16 %v451
          %v1997 = vunpack.c.l.b16 %v452
          %v1998 = vunpack.c.l.b16 %v453
          %v1999 = vunpack.c.l.b16 %v454
          %v2000 = vunpack.c.l.b16 %v455
          %v2001 = vunpack.c.l.b16 %v456
          %v2002 = vunpack.c.l.b16 %v457
          %v2003 = vunpack.c.l.b16 %v458
          %v2004 = vunpack.c.l.b16 %v459
          %v2005 = vunpack.c.l.b16 %v460
          %v2006 = vunpack.c.l.b16 %v461
          %v2007 = vunpack.c.l.b16 %v462
          %v2008 = vunpack.c.l.b16 %v463
          %v2009 = vunpack.c.l.b16 %v464
          %v2010 = vunpack.c.l.b16 %v465
          %v2011 = vunpack.c.l.b16 %v466
          %v2012 = vunpack.c.l.b16 %v467
          %v2013 = vunpack.c.l.b16 %v468
          %v2014 = vunpack.c.l.b16 %v469
          %v2015 = vunpack.c.l.b16 %v470
          %v2016 = vunpack.c.l.b16 %v471
          %v2017 = vunpack.c.l.b16 %v472
          %v2018 = vunpack.c.l.b16 %v473
          %v2019 = vunpack.c.l.b16 %v474
          %v2020 = vunpack.c.l.b16 %v475
          %v2021 = vunpack.c.l.b16 %v476
          %v2022 = vunpack.c.l.b16 %v477
          %v2023 = vunpack.c.l.b16 %v478
          %v2024 = vunpack.c.l.b16 %v479
          %v2025 = vunpack.c.l.b16 %v480
          %v2026 = vunpack.c.l.b16 %v481
          %v2027 = vunpack.c.l.b16 %v482
          %v2028 = vunpack.c.l.b16 %v483
          %v2029 = vunpack.c.l.b16 %v484
          %v2030 = vunpack.c.l.b16 %v485
          %v2031 = vunpack.c.l.b16 %v486
          %v2032 = vunpack.c.l.b16 %v487
          %v2033 = vunpack.c.l.b16 %v488
          %v2034 = vunpack.c.l.b16 %v489
          %v2035 = vunpack.c.l.b16 %v490
          %v2036 = vunpack.c.l.b16 %v491
          %v2037 = vunpack.c.l.b16 %v492
          %v2038 = vunpack.c.l.b16 %v493
          %v2039 = vunpack.c.l.b16 %v494
          %v2040 = vunpack.c.l.b16 %v495
          %v2041 = vunpack.c.l.b16 %v496
          %v2042 = vunpack.c.l.b16 %v497
          %v2043 = vunpack.c.l.b16 %v498
          %v2044 = vunpack.c.l.b16 %v499
          %v2045 = vunpack.c.l.b16 %v500
          %v2046 = vunpack.c.l.b16 %v501
          %v2047 = vunpack.c.l.b16 %v502
          %v2048 = vunpack.c.l.b16 %v503
          %v2049 = vunpack.c.l.b16 %v504
          %v2050 = vunpack.c.l.b16 %v505
          %v2051 = vunpack.c.l.b16 %v506
          %v2052 = vunpack.c.l.b16 %v507
          %v2053 = vunpack.c.l.b16 %v508
          %v2054 = vunpack.c.l.b16 %v509
          %v2055 = vunpack.c.l.b16 %v510
          %v2056 = vunpack.c.l.b16 %v511
          %v2057 = vunpack.c.l.b16 %v512
          %v2058 = vunpack.c.l.b16 %v513
          %v2059 = vunpack.c.l.b16 %v514
          %v2060 = vunpack.c.l.b16 %v515
          %v2061 = vunpack.c.l.b16 %v516
          %v2062 = vunpack.c.l.b16 %v517
          %v2063 = vunpack.c.l.b16 %v518
          %v2064 = vunpack.c.l.b16 %v519
          %v2065 = vunpack.c.l.b16 %v520
          %v2066 = vunpack.c.l.b16 %v521
          %v2067 = vunpack.c.l.b16 %v522
          %v2068 = vunpack.c.l.b16 %v523
          %v2069 = vunpack.c.l.b16 %v524
          %v2070 = vunpack.c.l.b16 %v525
          %v2071 = vunpack.c.l.b16 %v526
          %v2072 = vunpack.c.l.b16 %v527
          %v2073 = vunpack.c.l.b16 %v528
          %v2074 = vunpack.c.l.b16 %v529
          %v2075 = vunpack.c.l.b16 %v530
          %v2076 = vunpack.c.l.b16 %v531
          %v2077 = vunpack.c.l.b16 %v532
          %v2078 = vunpack.c.l.b16 %v533
          %v2079 = vunpack.c.l.b16 %v534
          %v2080 = vunpack.c.l.b16 %v535
          %v2081 = vunpack.c.l.b16 %v536
          %v2082 = vunpack.c.l.b16 %v537
          %v2083 = vunpack.c.l.b16 %v538
          %v2084 = vunpack.c.l.b16 %v539
          %v2085 = vunpack.c.l.b16 %v540
          %v2086 = vunpack.c.l.b16 %v541
          %v2087 = vunpack.c.l.b16 %v542
          %v2088 = vunpack.c.l.b16 %v543
          %v2089 = vunpack.c.l.b16 %v544
          %v2090 = vunpack.c.l.b16 %v545
          %v2091 = vunpack.c.l.b16 %v546
          %v2092 = vunpack.c.l.b16 %v547
          %v2093 = vunpack.c.l.b16 %v548
          %v2094 = vunpack.c.l.b16 %v549
          %v2095 = vunpack.c.l.b16 %v550
          %v2096 = vunpack.c.l.b16 %v551
          %v2097 = vunpack.c.l.b16 %v552
          %v2098 = vunpack.c.l.b16 %v553
          %v2099 = vunpack.c.l.b16 %v554
          %v2100 = vunpack.c.l.b16 %v555
          %v2101 = vunpack.c.l.b16 %v556
          %v2102 = vunpack.c.l.b16 %v557
          %v2103 = vunpack.c.l.b16 %v558
          %v2104 = vunpack.c.l.b16 %v559
          %v2105 = vunpack.c.l.b16 %v560
          %v2106 = vunpack.c.l.b16 %v561
          %v2107 = vunpack.c.l.b16 %v562
          %v2108 = vunpack.c.l.b16 %v563
          %v2109 = vunpack.c.l.b16 %v564
          %v2110 = vunpack.c.l.b16 %v565
          %v2111 = vunpack.c.l.b16 %v566
          %v2112 = vunpack.c.l.b16 %v567
          %v2113 = vunpack.c.l.b16 %v568
          %v2114 = vunpack.c.l.b16 %v569
          %v2115 = vunpack.c.l.b16 %v570
          %v2116 = vunpack.c.l.b16 %v571
          %v2117 = vunpack.c.l.b16 %v572
          %v2118 = vunpack.c.l.b16 %v573
          %v2119 = vunpack.c.l.b16 %v574
          %v2120 = vunpack.c.l.b16 %v575
          %v2121 = vunpack.c.l.b16 %v576
          %v2122 = vunpack.c.l.b16 %v577
          %v2123 = vpack.c.b16 %v1868, %v1867
          %v2124 = vpack.c.b16 %v1870, %v1869
          %v2125 = vpack.c.b16 %v1872, %v1871
          %v2126 = vpack.c.b16 %v1874, %v1873
          %v2127 = vpack.c.b16 %v1876, %v1875
          %v2128 = vpack.c.b16 %v1878, %v1877
          %v2129 = vpack.c.b16 %v1880, %v1879
          %v2130 = vpack.c.b16 %v1882, %v1881
          %v2131 = vpack.c.b16 %v1884, %v1883
          %v2132 = vpack.c.b16 %v1886, %v1885
          %v2133 = vpack.c.b16 %v1888, %v1887
          %v2134 = vpack.c.b16 %v1890, %v1889
          %v2135 = vpack.c.b16 %v1892, %v1891
          %v2136 = vpack.c.b16 %v1894, %v1893
          %v2137 = vpack.c.b16 %v1896, %v1895
          %v2138 = vpack.c.b16 %v1898, %v1897
          %v2139 = vpack.c.b16 %v1900, %v1899
          %v2140 = vpack.c.b16 %v1902, %v1901
          %v2141 = vpack.c.b16 %v1904, %v1903
          %v2142 = vpack.c.b16 %v1906, %v1905
          %v2143 = vpack.c.b16 %v1908, %v1907
          %v2144 = vpack.c.b16 %v1910, %v1909
          %v2145 = vpack.c.b16 %v1912, %v1911
          %v2146 = vpack.c.b16 %v1914, %v1913
          %v2147 = vpack.c.b16 %v1916, %v1915
          %v2148 = vpack.c.b16 %v1918, %v1917
          %v2149 = vpack.c.b16 %v1920, %v1919
          %v2150 = vpack.c.b16 %v1922, %v1921
          %v2151 = vpack.c.b16 %v1924, %v1923
          %v2152 = vpack.c.b16 %v1926, %v1925
          %v2153 = vpack.c.b16 %v1928, %v1927
          %v2154 = vpack.c.b16 %v1930, %v1929
          %v2155 = vpack.c.b16 %v1932, %v1931
          %v2156 = vpack.c.b16 %v1934, %v1933
          %v2157 = vpack.c.b16 %v1936, %v1935
          %v2158 = vpack.c.b16 %v1938, %v1937
          %v2159 = vpack.c.b16 %v1940, %v1939
          %v2160 = vpack.c.b16 %v1942, %v1941
          %v2161 = vpack.c.b16 %v1944, %v1943
          %v2162 = vpack.c.b16 %v1946, %v1945
          %v2163 = vpack.c.b16 %v1948, %v1947
          %v2164 = vpack.c.b16 %v1950, %v1949
          %v2165 = vpack.c.b16 %v1952, %v1951
          %v2166 = vpack.c.b16 %v1954, %v1953
          %v2167 = vpack.c.b16 %v1956, %v1955
          %v2168 = vpack.c.b16 %v1958, %v1957
          %v2169 = vpack.c.b16 %v1960, %v1959
          %v2170 = vpack.c.b16 %v1962, %v1961
          %v2171 = vpack.c.b16 %v1964, %v1963
          %v2172 = vpack.c.b16 %v1966, %v1965
          %v2173 = vpack.c.b16 %v1968, %v1967
          %v2174 = vpack.c.b16 %v1970, %v1969
          %v2175 = vpack.c.b16 %v1972, %v1971
          %v2176 = vpack.c.b16 %v1974, %v1973
          %v2177 = vpack.c.b16 %v1976, %v1975
          %v2178 = vpack.c.b16 %v1978, %v1977
          %v2179 = vpack.c.b16 %v1980, %v1979
          %v2180 = vpack.c.b16 %v1982, %v1981
          %v2181 = vpack.c.b16 %v1984, %v1983
          %v2182 = vpack.c.b16 %v1986, %v1985
          %v2183 = vpack.c.b16 %v1988, %v1987
          %v2184 = vpack.c.b16 %v1990, %v1989
          %v2185 = vpack.c.b16 %v1992, %v1991
          %v2186 = vpack.c.b16 %v1994, %v1993
          %v2187 = vpack.c.b16 %v1996, %v1995
          %v2188 = vpack.c.b16 %v1998, %v1997
          %v2189 = vpack.c.b16 %v2000, %v1999
          %v2190 = vpack.c.b16 %v2002, %v2001
          %v2191 = vpack.c.b16 %v2004, %v2003
          %v2192 = vpack.c.b16 %v2006, %v2005
          %v2193 = vpack.c.b16 %v2008, %v2007
          %v2194 = vpack.c.b16 %v2010, %v2009
          %v2195 = vpack.c.b16 %v2012, %v2011
          %v2196 = vpack.c.b16 %v2014, %v2013
          %v2197 = vpack.c.b16 %v2016, %v2015
          %v2198 = vpack.c.b16 %v2018, %v2017
          %v2199 = vpack.c.b16 %v2020, %v2019
          %v2200 = vpack.c.b16 %v2022, %v2021
          %v2201 = vpack.c.b16 %v2024, %v2023
          %v2202 = vpack.c.b16 %v2026, %v2025
          %v2203 = vpack.c.b16 %v2028, %v2027
          %v2204 = vpack.c.b16 %v2030, %v2029
          %v2205 = vpack.c.b16 %v2032, %v2031
          %v2206 = vpack.c.b16 %v2034, %v2033
          %v2207 = vpack.c.b16 %v2036, %v2035
          %v2208 = vpack.c.b16 %v2038, %v2037
          %v2209 = vpack.c.b16 %v2040, %v2039
          %v2210 = vpack.c.b16 %v2042, %v2041
          %v2211 = vpack.c.b16 %v2044, %v2043
          %v2212 = vpack.c.b16 %v2046, %v2045
          %v2213 = vpack.c.b16 %v2048, %v2047
          %v2214 = vpack.c.b16 %v2050, %v2049
          %v2215 = vpack.c.b16 %v2052, %v2051
          %v2216 = vpack.c.b16 %v2054, %v2053
          %v2217 = vpack.c.b16 %v2056, %v2055
          %v2218 = vpack.c.b16 %v2058, %v2057
          %v2219 = vpack.c.b16 %v2060, %v2059
          %v2220 = vpack.c.b16 %v2062, %v2061
          %v2221 = vpack.c.b16 %v2064, %v2063
          %v2222 = vpack.c.b16 %v2066, %v2065
          %v2223 = vpack.c.b16 %v2068, %v2067
          %v2224 = vpack.c.b16 %v2070, %v2069
          %v2225 = vpack.c.b16 %v2072, %v2071
          %v2226 = vpack.c.b16 %v2074, %v2073
          %v2227 = vpack.c.b16 %v2076, %v2075
          %v2228 = vpack.c.b16 %v2078, %v2077
          %v2229 = vpack.c.b16 %v2080, %v2079
          %v2230 = vpack.c.b16 %v2082, %v2081
          %v2231 = vpack.c.b16 %v2084, %v2083
          %v2232 = vpack.c.b16 %v2086, %v2085
          %v2233 = vpack.c.b16 %v2088, %v2087
          %v2234 = vpack.c.b16 %v2090, %v2089
          %v2235 = vpack.c.b16 %v2092, %v2091
          %v2236 = vpack.c.b16 %v2094, %v2093
          %v2237 = vpack.c.b16 %v2096, %v2095
          %v2238 = vpack.c.b16 %v2098, %v2097
          %v2239 = vpack.c.b16 %v2100, %v2099
          %v2240 = vpack.c.b16 %v2102, %v2101
          %v2241 = vpack.c.b16 %v2104, %v2103
          %v2242 = vpack.c.b16 %v2106, %v2105
          %v2243 = vpack.c.b16 %v2108, %v2107
          %v2244 = vpack.c.b16 %v2110, %v2109
          %v2245 = vpack.c.b16 %v2112, %v2111
          %v2246 = vpack.c.b16 %v2114, %v2113
          %v2247 = vpack.c.b16 %v2116, %v2115
          %v2248 = vpack.c.b16 %v2118, %v2117
          %v2249 = vpack.c.b16 %v2120, %v2119
          %v2250 = vpack.c.b16 %v2122, %v2121
          %2379 = vmatprep.subr.bf16.mxu0 0
          %2380 = vmatpush1.bf16.msra.mxu0 %v2130
          %2381 = vmatprep.subr.bf16.mxu0 0
          %2382 = vmatpush1.bf16.msra.mxu0 %v2129
          %2383 = vmatprep.subr.bf16.mxu0 0
          %2384 = vmatpush1.bf16.msra.mxu0 %v2128
          %2385 = vmatprep.subr.bf16.mxu0 0
          %2386 = vmatpush1.bf16.msra.mxu0 %v2127
          %2387 = vmatprep.subr.bf16.mxu0 0
          %2388 = vmatpush1.bf16.msra.mxu0 %v2126
          %2389 = vmatprep.subr.bf16.mxu0 0
          %2390 = vmatpush1.bf16.msra.mxu0 %v2125
          %2391 = vmatprep.subr.bf16.mxu0 0
          %2392 = vmatpush1.bf16.msra.mxu0 %v2124
          %2393 = vmatprep.subr.bf16.mxu0 0
          %2394 = vmatpush1.bf16.msra.mxu0 %v2123
          %2395 = vmatprep.subr.bf16.mxu0 0
          %2396 = vmatpush2.bf16.msra.mxu0 %v2138
          %2397 = vmatprep.subr.bf16.mxu0 0
          %2398 = vmatpush2.bf16.msra.mxu0 %v2137
          %2399 = vmatprep.subr.bf16.mxu0 0
          %2400 = vmatpush2.bf16.msra.mxu0 %v2136
          %2401 = vmatprep.subr.bf16.mxu0 0
          %2402 = vmatpush2.bf16.msra.mxu0 %v2135
          %2403 = vmatprep.subr.bf16.mxu0 0
          %2404 = vmatpush2.bf16.msra.mxu0 %v2134
          %2405 = vmatprep.subr.bf16.mxu0 0
          %2406 = vmatpush2.bf16.msra.mxu0 %v2133
          %2407 = vmatprep.subr.bf16.mxu0 0
          %2408 = vmatpush2.bf16.msra.mxu0 %v2132
          %2409 = vmatprep.subr.bf16.mxu0 0
          %2410 = vmatpush2.bf16.msra.mxu0 %v2131
          %2411 = vmatprep.mubr.bf16.mxu0 %v1484
          %2412 = vmatmul.mubr.bf16.gmra.mxu0 %v1483
          %v2413 = vpop.f32.mrf.mxu0
          %v2414 = vadd.f32 0.0, %v2413
          %v2415 = vpop.f32.mrf.mxu0
          %v2416 = vpop.f32.mrf.mxu0
          %v2417 = vadd.f32 0.0, %v2416
          %v2418 = vpop.f32.mrf.mxu0
          %2419 = vmatprep.mubr.bf16.mxu0 %v1500
          %2420 = vmatmul.mubr.bf16.gmra.mxu0 %v1499
          %v2421 = vpop.f32.mrf.mxu0
          %v2422 = vadd.f32 0.0, %v2421
          %v2423 = vpop.f32.mrf.mxu0
          %v2424 = vpop.f32.mrf.mxu0
          %v2425 = vadd.f32 0.0, %v2424
          %v2426 = vpop.f32.mrf.mxu0
          %2427 = vmatprep.mubr.bf16.mxu0 %v1516
          %2428 = vmatmul.mubr.bf16.gmra.mxu0 %v1515
          %v2429 = vpop.f32.mrf.mxu0
          %v2430 = vadd.f32 0.0, %v2429
          %v2431 = vpop.f32.mrf.mxu0
          %v2432 = vpop.f32.mrf.mxu0
          %v2433 = vadd.f32 0.0, %v2432
          %v2434 = vpop.f32.mrf.mxu0
          %2435 = vmatprep.mubr.bf16.mxu0 %v1532
          %2436 = vmatmul.mubr.bf16.gmra.mxu0 %v1531
          %v2437 = vpop.f32.mrf.mxu0
          %v2438 = vadd.f32 0.0, %v2437
          %v2439 = vpop.f32.mrf.mxu0
          %v2440 = vpop.f32.mrf.mxu0
          %v2441 = vadd.f32 0.0, %v2440
          %v2442 = vpop.f32.mrf.mxu0
          %2443 = vmatprep.mubr.bf16.mxu0 %v1548
          %2444 = vmatmul.mubr.bf16.gmra.mxu0 %v1547
          %v2445 = vpop.f32.mrf.mxu0
          %v2446 = vadd.f32 0.0, %v2445
          %v2447 = vpop.f32.mrf.mxu0
          %v2448 = vpop.f32.mrf.mxu0
          %v2449 = vadd.f32 0.0, %v2448
          %v2450 = vpop.f32.mrf.mxu0
          %2451 = vmatprep.mubr.bf16.mxu0 %v1564
          %2452 = vmatmul.mubr.bf16.gmra.mxu0 %v1563
          %v2453 = vpop.f32.mrf.mxu0
          %v2454 = vadd.f32 0.0, %v2453
          %v2455 = vpop.f32.mrf.mxu0
          %v2456 = vpop.f32.mrf.mxu0
          %v2457 = vadd.f32 0.0, %v2456
          %v2458 = vpop.f32.mrf.mxu0
          %2459 = vmatprep.mubr.bf16.mxu0 %v1580
          %2460 = vmatmul.mubr.bf16.gmra.mxu0 %v1579
          %v2461 = vpop.f32.mrf.mxu0
          %v2462 = vadd.f32 0.0, %v2461
          %v2463 = vpop.f32.mrf.mxu0
          %v2464 = vpop.f32.mrf.mxu0
          %v2465 = vadd.f32 0.0, %v2464
          %v2466 = vpop.f32.mrf.mxu0
          %2467 = vmatprep.mubr.bf16.mxu0 %v1596
          %2468 = vmatmul.mubr.bf16.gmra.mxu0 %v1595
          %v2469 = vpop.f32.mrf.mxu0
          %v2470 = vadd.f32 0.0, %v2469
          %v2471 = vpop.f32.mrf.mxu0
          %v2472 = vpop.f32.mrf.mxu0
          %v2473 = vadd.f32 0.0, %v2472
          %v2474 = vpop.f32.mrf.mxu0
          %2475 = vdwg.mxu0
          %2476 = vmatprep.subr.bf16.mxu0 0
          %2477 = vmatpush1.bf16.msra.mxu0 %v2146
          %2478 = vmatprep.subr.bf16.mxu0 0
          %2479 = vmatpush1.bf16.msra.mxu0 %v2145
          %2480 = vmatprep.subr.bf16.mxu0 0
          %2481 = vmatpush1.bf16.msra.mxu0 %v2144
          %2482 = vmatprep.subr.bf16.mxu0 0
          %2483 = vmatpush1.bf16.msra.mxu0 %v2143
          %2484 = vmatprep.subr.bf16.mxu0 0
          %2485 = vmatpush1.bf16.msra.mxu0 %v2142
          %2486 = vmatprep.subr.bf16.mxu0 0
          %2487 = vmatpush1.bf16.msra.mxu0 %v2141
          %2488 = vmatprep.subr.bf16.mxu0 0
          %2489 = vmatpush1.bf16.msra.mxu0 %v2140
          %2490 = vmatprep.subr.bf16.mxu0 0
          %2491 = vmatpush1.bf16.msra.mxu0 %v2139
          %2492 = vmatprep.subr.bf16.mxu0 0
          %2493 = vmatpush2.bf16.msra.mxu0 %v2154
          %2494 = vmatprep.subr.bf16.mxu0 0
          %2495 = vmatpush2.bf16.msra.mxu0 %v2153
          %2496 = vmatprep.subr.bf16.mxu0 0
          %2497 = vmatpush2.bf16.msra.mxu0 %v2152
          %2498 = vmatprep.subr.bf16.mxu0 0
          %2499 = vmatpush2.bf16.msra.mxu0 %v2151
          %2500 = vmatprep.subr.bf16.mxu0 0
          %2501 = vmatpush2.bf16.msra.mxu0 %v2150
          %2502 = vmatprep.subr.bf16.mxu0 0
          %2503 = vmatpush2.bf16.msra.mxu0 %v2149
          %2504 = vmatprep.subr.bf16.mxu0 0
          %2505 = vmatpush2.bf16.msra.mxu0 %v2148
          %2506 = vmatprep.subr.bf16.mxu0 0
          %2507 = vmatpush2.bf16.msra.mxu0 %v2147
          %2508 = vmatprep.mubr.bf16.mxu0 %v1486
          %2509 = vmatmul.mubr.bf16.gmra.mxu0 %v1485
          %v2510 = vpop.f32.mrf.mxu0
          %v2511 = vadd.f32 %v2414, %v2510
          %v2512 = vpop.f32.mrf.mxu0
          %v2513 = vpop.f32.mrf.mxu0
          %v2514 = vadd.f32 %v2417, %v2513
          %v2515 = vpop.f32.mrf.mxu0
          %2516 = vmatprep.mubr.bf16.mxu0 %v1502
          %2517 = vmatmul.mubr.bf16.gmra.mxu0 %v1501
          %v2518 = vpop.f32.mrf.mxu0
          %v2519 = vadd.f32 %v2422, %v2518
          %v2520 = vpop.f32.mrf.mxu0
          %v2521 = vpop.f32.mrf.mxu0
          %v2522 = vadd.f32 %v2425, %v2521
          %v2523 = vpop.f32.mrf.mxu0
          %2524 = vmatprep.mubr.bf16.mxu0 %v1518
          %2525 = vmatmul.mubr.bf16.gmra.mxu0 %v1517
          %v2526 = vpop.f32.mrf.mxu0
          %v2527 = vadd.f32 %v2430, %v2526
          %v2528 = vpop.f32.mrf.mxu0
          %v2529 = vpop.f32.mrf.mxu0
          %v2530 = vadd.f32 %v2433, %v2529
          %v2531 = vpop.f32.mrf.mxu0
          %2532 = vmatprep.mubr.bf16.mxu0 %v1534
          %2533 = vmatmul.mubr.bf16.gmra.mxu0 %v1533
          %v2534 = vpop.f32.mrf.mxu0
          %v2535 = vadd.f32 %v2438, %v2534
          %v2536 = vpop.f32.mrf.mxu0
          %v2537 = vpop.f32.mrf.mxu0
          %v2538 = vadd.f32 %v2441, %v2537
          %v2539 = vpop.f32.mrf.mxu0
          %2540 = vmatprep.mubr.bf16.mxu0 %v1550
          %2541 = vmatmul.mubr.bf16.gmra.mxu0 %v1549
          %v2542 = vpop.f32.mrf.mxu0
          %v2543 = vadd.f32 %v2446, %v2542
          %v2544 = vpop.f32.mrf.mxu0
          %v2545 = vpop.f32.mrf.mxu0
          %v2546 = vadd.f32 %v2449, %v2545
          %v2547 = vpop.f32.mrf.mxu0
          %2548 = vmatprep.mubr.bf16.mxu0 %v1566
          %2549 = vmatmul.mubr.bf16.gmra.mxu0 %v1565
          %v2550 = vpop.f32.mrf.mxu0
          %v2551 = vadd.f32 %v2454, %v2550
          %v2552 = vpop.f32.mrf.mxu0
          %v2553 = vpop.f32.mrf.mxu0
          %v2554 = vadd.f32 %v2457, %v2553
          %v2555 = vpop.f32.mrf.mxu0
          %2556 = vmatprep.mubr.bf16.mxu0 %v1582
          %2557 = vmatmul.mubr.bf16.gmra.mxu0 %v1581
          %v2558 = vpop.f32.mrf.mxu0
          %v2559 = vadd.f32 %v2462, %v2558
          %v2560 = vpop.f32.mrf.mxu0
          %v2561 = vpop.f32.mrf.mxu0
          %v2562 = vadd.f32 %v2465, %v2561
          %v2563 = vpop.f32.mrf.mxu0
          %2564 = vmatprep.mubr.bf16.mxu0 %v1598
          %2565 = vmatmul.mubr.bf16.gmra.mxu0 %v1597
          %v2566 = vpop.f32.mrf.mxu0
          %v2567 = vadd.f32 %v2470, %v2566
          %v2568 = vpop.f32.mrf.mxu0
          %v2569 = vpop.f32.mrf.mxu0
          %v2570 = vadd.f32 %v2473, %v2569
          %v2571 = vpop.f32.mrf.mxu0
          %2572 = vdwg.mxu0
          %2573 = vmatprep.subr.bf16.mxu0 0
          %2574 = vmatpush1.bf16.msra.mxu0 %v2162
          %2575 = vmatprep.subr.bf16.mxu0 0
          %2576 = vmatpush1.bf16.msra.mxu0 %v2161
          %2577 = vmatprep.subr.bf16.mxu0 0
          %2578 = vmatpush1.bf16.msra.mxu0 %v2160
          %2579 = vmatprep.subr.bf16.mxu0 0
          %2580 = vmatpush1.bf16.msra.mxu0 %v2159
          %2581 = vmatprep.subr.bf16.mxu0 0
          %2582 = vmatpush1.bf16.msra.mxu0 %v2158
          %2583 = vmatprep.subr.bf16.mxu0 0
          %2584 = vmatpush1.bf16.msra.mxu0 %v2157
          %2585 = vmatprep.subr.bf16.mxu0 0
          %2586 = vmatpush1.bf16.msra.mxu0 %v2156
          %2587 = vmatprep.subr.bf16.mxu0 0
          %2588 = vmatpush1.bf16.msra.mxu0 %v2155
          %2589 = vmatprep.subr.bf16.mxu0 0
          %2590 = vmatpush2.bf16.msra.mxu0 %v2170
          %2591 = vmatprep.subr.bf16.mxu0 0
          %2592 = vmatpush2.bf16.msra.mxu0 %v2169
          %2593 = vmatprep.subr.bf16.mxu0 0
          %2594 = vmatpush2.bf16.msra.mxu0 %v2168
          %2595 = vmatprep.subr.bf16.mxu0 0
          %2596 = vmatpush2.bf16.msra.mxu0 %v2167
          %2597 = vmatprep.subr.bf16.mxu0 0
          %2598 = vmatpush2.bf16.msra.mxu0 %v2166
          %2599 = vmatprep.subr.bf16.mxu0 0
          %2600 = vmatpush2.bf16.msra.mxu0 %v2165
          %2601 = vmatprep.subr.bf16.mxu0 0
          %2602 = vmatpush2.bf16.msra.mxu0 %v2164
          %2603 = vmatprep.subr.bf16.mxu0 0
          %2604 = vmatpush2.bf16.msra.mxu0 %v2163
          %2605 = vmatprep.mubr.bf16.mxu0 %v1488
          %2606 = vmatmul.mubr.bf16.gmra.mxu0 %v1487
          %v2607 = vpop.f32.mrf.mxu0
          %v2608 = vadd.f32 %v2511, %v2607
          %v2609 = vpop.f32.mrf.mxu0
          %v2610 = vpop.f32.mrf.mxu0
          %v2611 = vadd.f32 %v2514, %v2610
          %v2612 = vpop.f32.mrf.mxu0
          %2613 = vmatprep.mubr.bf16.mxu0 %v1504
          %2614 = vmatmul.mubr.bf16.gmra.mxu0 %v1503
          %v2615 = vpop.f32.mrf.mxu0
          %v2616 = vadd.f32 %v2519, %v2615
          %v2617 = vpop.f32.mrf.mxu0
          %v2618 = vpop.f32.mrf.mxu0
          %v2619 = vadd.f32 %v2522, %v2618
          %v2620 = vpop.f32.mrf.mxu0
          %2621 = vmatprep.mubr.bf16.mxu0 %v1520
          %2622 = vmatmul.mubr.bf16.gmra.mxu0 %v1519
          %v2623 = vpop.f32.mrf.mxu0
          %v2624 = vadd.f32 %v2527, %v2623
          %v2625 = vpop.f32.mrf.mxu0
          %v2626 = vpop.f32.mrf.mxu0
          %v2627 = vadd.f32 %v2530, %v2626
          %v2628 = vpop.f32.mrf.mxu0
          %2629 = vmatprep.mubr.bf16.mxu0 %v1536
          %2630 = vmatmul.mubr.bf16.gmra.mxu0 %v1535
          %v2631 = vpop.f32.mrf.mxu0
          %v2632 = vadd.f32 %v2535, %v2631
          %v2633 = vpop.f32.mrf.mxu0
          %v2634 = vpop.f32.mrf.mxu0
          %v2635 = vadd.f32 %v2538, %v2634
          %v2636 = vpop.f32.mrf.mxu0
          %2637 = vmatprep.mubr.bf16.mxu0 %v1552
          %2638 = vmatmul.mubr.bf16.gmra.mxu0 %v1551
          %v2639 = vpop.f32.mrf.mxu0
          %v2640 = vadd.f32 %v2543, %v2639
          %v2641 = vpop.f32.mrf.mxu0
          %v2642 = vpop.f32.mrf.mxu0
          %v2643 = vadd.f32 %v2546, %v2642
          %v2644 = vpop.f32.mrf.mxu0
          %2645 = vmatprep.mubr.bf16.mxu0 %v1568
          %2646 = vmatmul.mubr.bf16.gmra.mxu0 %v1567
          %v2647 = vpop.f32.mrf.mxu0
          %v2648 = vadd.f32 %v2551, %v2647
          %v2649 = vpop.f32.mrf.mxu0
          %v2650 = vpop.f32.mrf.mxu0
          %v2651 = vadd.f32 %v2554, %v2650
          %v2652 = vpop.f32.mrf.mxu0
          %2653 = vmatprep.mubr.bf16.mxu0 %v1584
          %2654 = vmatmul.mubr.bf16.gmra.mxu0 %v1583
          %v2655 = vpop.f32.mrf.mxu0
          %v2656 = vadd.f32 %v2559, %v2655
          %v2657 = vpop.f32.mrf.mxu0
          %v2658 = vpop.f32.mrf.mxu0
          %v2659 = vadd.f32 %v2562, %v2658
          %v2660 = vpop.f32.mrf.mxu0
          %2661 = vmatprep.mubr.bf16.mxu0 %v1600
          %2662 = vmatmul.mubr.bf16.gmra.mxu0 %v1599
          %v2663 = vpop.f32.mrf.mxu0
          %v2664 = vadd.f32 %v2567, %v2663
          %v2665 = vpop.f32.mrf.mxu0
          %v2666 = vpop.f32.mrf.mxu0
          %v2667 = vadd.f32 %v2570, %v2666
          %v2668 = vpop.f32.mrf.mxu0
          %2669 = vdwg.mxu0
          %2670 = vmatprep.subr.bf16.mxu0 0
          %2671 = vmatpush1.bf16.msra.mxu0 %v2178
          %2672 = vmatprep.subr.bf16.mxu0 0
          %2673 = vmatpush1.bf16.msra.mxu0 %v2177
          %2674 = vmatprep.subr.bf16.mxu0 0
          %2675 = vmatpush1.bf16.msra.mxu0 %v2176
          %2676 = vmatprep.subr.bf16.mxu0 0
          %2677 = vmatpush1.bf16.msra.mxu0 %v2175
          %2678 = vmatprep.subr.bf16.mxu0 0
          %2679 = vmatpush1.bf16.msra.mxu0 %v2174
          %2680 = vmatprep.subr.bf16.mxu0 0
          %2681 = vmatpush1.bf16.msra.mxu0 %v2173
          %2682 = vmatprep.subr.bf16.mxu0 0
          %2683 = vmatpush1.bf16.msra.mxu0 %v2172
          %2684 = vmatprep.subr.bf16.mxu0 0
          %2685 = vmatpush1.bf16.msra.mxu0 %v2171
          %2686 = vmatprep.subr.bf16.mxu0 0
          %2687 = vmatpush2.bf16.msra.mxu0 %v2186
          %2688 = vmatprep.subr.bf16.mxu0 0
          %2689 = vmatpush2.bf16.msra.mxu0 %v2185
          %2690 = vmatprep.subr.bf16.mxu0 0
          %2691 = vmatpush2.bf16.msra.mxu0 %v2184
          %2692 = vmatprep.subr.bf16.mxu0 0
          %2693 = vmatpush2.bf16.msra.mxu0 %v2183
          %2694 = vmatprep.subr.bf16.mxu0 0
          %2695 = vmatpush2.bf16.msra.mxu0 %v2182
          %2696 = vmatprep.subr.bf16.mxu0 0
          %2697 = vmatpush2.bf16.msra.mxu0 %v2181
          %2698 = vmatprep.subr.bf16.mxu0 0
          %2699 = vmatpush2.bf16.msra.mxu0 %v2180
          %2700 = vmatprep.subr.bf16.mxu0 0
          %2701 = vmatpush2.bf16.msra.mxu0 %v2179
          %2702 = vmatprep.mubr.bf16.mxu0 %v1490
          %2703 = vmatmul.mubr.bf16.gmra.mxu0 %v1489
          %v2704 = vpop.f32.mrf.mxu0
          %v2705 = vadd.f32 %v2608, %v2704
          %v2706 = vpop.f32.mrf.mxu0
          %v2707 = vpop.f32.mrf.mxu0
          %v2708 = vadd.f32 %v2611, %v2707
          %v2709 = vpop.f32.mrf.mxu0
          %2710 = vmatprep.mubr.bf16.mxu0 %v1506
          %2711 = vmatmul.mubr.bf16.gmra.mxu0 %v1505
          %v2712 = vpop.f32.mrf.mxu0
          %v2713 = vadd.f32 %v2616, %v2712
          %v2714 = vpop.f32.mrf.mxu0
          %v2715 = vpop.f32.mrf.mxu0
          %v2716 = vadd.f32 %v2619, %v2715
          %v2717 = vpop.f32.mrf.mxu0
          %2718 = vmatprep.mubr.bf16.mxu0 %v1522
          %2719 = vmatmul.mubr.bf16.gmra.mxu0 %v1521
          %v2720 = vpop.f32.mrf.mxu0
          %v2721 = vadd.f32 %v2624, %v2720
          %v2722 = vpop.f32.mrf.mxu0
          %v2723 = vpop.f32.mrf.mxu0
          %v2724 = vadd.f32 %v2627, %v2723
          %v2725 = vpop.f32.mrf.mxu0
          %2726 = vmatprep.mubr.bf16.mxu0 %v1538
          %2727 = vmatmul.mubr.bf16.gmra.mxu0 %v1537
          %v2728 = vpop.f32.mrf.mxu0
          %v2729 = vadd.f32 %v2632, %v2728
          %v2730 = vpop.f32.mrf.mxu0
          %v2731 = vpop.f32.mrf.mxu0
          %v2732 = vadd.f32 %v2635, %v2731
          %v2733 = vpop.f32.mrf.mxu0
          %2734 = vmatprep.mubr.bf16.mxu0 %v1554
          %2735 = vmatmul.mubr.bf16.gmra.mxu0 %v1553
          %v2736 = vpop.f32.mrf.mxu0
          %v2737 = vadd.f32 %v2640, %v2736
          %v2738 = vpop.f32.mrf.mxu0
          %v2739 = vpop.f32.mrf.mxu0
          %v2740 = vadd.f32 %v2643, %v2739
          %v2741 = vpop.f32.mrf.mxu0
          %2742 = vmatprep.mubr.bf16.mxu0 %v1570
          %2743 = vmatmul.mubr.bf16.gmra.mxu0 %v1569
          %v2744 = vpop.f32.mrf.mxu0
          %v2745 = vadd.f32 %v2648, %v2744
          %v2746 = vpop.f32.mrf.mxu0
          %v2747 = vpop.f32.mrf.mxu0
          %v2748 = vadd.f32 %v2651, %v2747
          %v2749 = vpop.f32.mrf.mxu0
          %2750 = vmatprep.mubr.bf16.mxu0 %v1586
          %2751 = vmatmul.mubr.bf16.gmra.mxu0 %v1585
          %v2752 = vpop.f32.mrf.mxu0
          %v2753 = vadd.f32 %v2656, %v2752
          %v2754 = vpop.f32.mrf.mxu0
          %v2755 = vpop.f32.mrf.mxu0
          %v2756 = vadd.f32 %v2659, %v2755
          %v2757 = vpop.f32.mrf.mxu0
          %2758 = vmatprep.mubr.bf16.mxu0 %v1602
          %2759 = vmatmul.mubr.bf16.gmra.mxu0 %v1601
          %v2760 = vpop.f32.mrf.mxu0
          %v2761 = vadd.f32 %v2664, %v2760
          %v2762 = vpop.f32.mrf.mxu0
          %v2763 = vpop.f32.mrf.mxu0
          %v2764 = vadd.f32 %v2667, %v2763
          %v2765 = vpop.f32.mrf.mxu0
          %2766 = vdwg.mxu0
          %2767 = vmatprep.subr.bf16.mxu0 0
          %2768 = vmatpush1.bf16.msra.mxu0 %v2194
          %2769 = vmatprep.subr.bf16.mxu0 0
          %2770 = vmatpush1.bf16.msra.mxu0 %v2193
          %2771 = vmatprep.subr.bf16.mxu0 0
          %2772 = vmatpush1.bf16.msra.mxu0 %v2192
          %2773 = vmatprep.subr.bf16.mxu0 0
          %2774 = vmatpush1.bf16.msra.mxu0 %v2191
          %2775 = vmatprep.subr.bf16.mxu0 0
          %2776 = vmatpush1.bf16.msra.mxu0 %v2190
          %2777 = vmatprep.subr.bf16.mxu0 0
          %2778 = vmatpush1.bf16.msra.mxu0 %v2189
          %2779 = vmatprep.subr.bf16.mxu0 0
          %2780 = vmatpush1.bf16.msra.mxu0 %v2188
          %2781 = vmatprep.subr.bf16.mxu0 0
          %2782 = vmatpush1.bf16.msra.mxu0 %v2187
          %2783 = vmatprep.subr.bf16.mxu0 0
          %2784 = vmatpush2.bf16.msra.mxu0 %v2202
          %2785 = vmatprep.subr.bf16.mxu0 0
          %2786 = vmatpush2.bf16.msra.mxu0 %v2201
          %2787 = vmatprep.subr.bf16.mxu0 0
          %2788 = vmatpush2.bf16.msra.mxu0 %v2200
          %2789 = vmatprep.subr.bf16.mxu0 0
          %2790 = vmatpush2.bf16.msra.mxu0 %v2199
          %2791 = vmatprep.subr.bf16.mxu0 0
          %2792 = vmatpush2.bf16.msra.mxu0 %v2198
          %2793 = vmatprep.subr.bf16.mxu0 0
          %2794 = vmatpush2.bf16.msra.mxu0 %v2197
          %2795 = vmatprep.subr.bf16.mxu0 0
          %2796 = vmatpush2.bf16.msra.mxu0 %v2196
          %2797 = vmatprep.subr.bf16.mxu0 0
          %2798 = vmatpush2.bf16.msra.mxu0 %v2195
          %2799 = vmatprep.mubr.bf16.mxu0 %v1492
          %2800 = vmatmul.mubr.bf16.gmra.mxu0 %v1491
          %v2801 = vpop.f32.mrf.mxu0
          %v2802 = vadd.f32 %v2705, %v2801
          %v2803 = vpop.f32.mrf.mxu0
          %v2804 = vpop.f32.mrf.mxu0
          %v2805 = vadd.f32 %v2708, %v2804
          %v2806 = vpop.f32.mrf.mxu0
          %2807 = vmatprep.mubr.bf16.mxu0 %v1508
          %2808 = vmatmul.mubr.bf16.gmra.mxu0 %v1507
          %v2809 = vpop.f32.mrf.mxu0
          %v2810 = vadd.f32 %v2713, %v2809
          %v2811 = vpop.f32.mrf.mxu0
          %v2812 = vpop.f32.mrf.mxu0
          %v2813 = vadd.f32 %v2716, %v2812
          %v2814 = vpop.f32.mrf.mxu0
          %2815 = vmatprep.mubr.bf16.mxu0 %v1524
          %2816 = vmatmul.mubr.bf16.gmra.mxu0 %v1523
          %v2817 = vpop.f32.mrf.mxu0
          %v2818 = vadd.f32 %v2721, %v2817
          %v2819 = vpop.f32.mrf.mxu0
          %v2820 = vpop.f32.mrf.mxu0
          %v2821 = vadd.f32 %v2724, %v2820
          %v2822 = vpop.f32.mrf.mxu0
          %2823 = vmatprep.mubr.bf16.mxu0 %v1540
          %2824 = vmatmul.mubr.bf16.gmra.mxu0 %v1539
          %v2825 = vpop.f32.mrf.mxu0
          %v2826 = vadd.f32 %v2729, %v2825
          %v2827 = vpop.f32.mrf.mxu0
          %v2828 = vpop.f32.mrf.mxu0
          %v2829 = vadd.f32 %v2732, %v2828
          %v2830 = vpop.f32.mrf.mxu0
          %2831 = vmatprep.mubr.bf16.mxu0 %v1556
          %2832 = vmatmul.mubr.bf16.gmra.mxu0 %v1555
          %v2833 = vpop.f32.mrf.mxu0
          %v2834 = vadd.f32 %v2737, %v2833
          %v2835 = vpop.f32.mrf.mxu0
          %v2836 = vpop.f32.mrf.mxu0
          %v2837 = vadd.f32 %v2740, %v2836
          %v2838 = vpop.f32.mrf.mxu0
          %2839 = vmatprep.mubr.bf16.mxu0 %v1572
          %2840 = vmatmul.mubr.bf16.gmra.mxu0 %v1571
          %v2841 = vpop.f32.mrf.mxu0
          %v2842 = vadd.f32 %v2745, %v2841
          %v2843 = vpop.f32.mrf.mxu0
          %v2844 = vpop.f32.mrf.mxu0
          %v2845 = vadd.f32 %v2748, %v2844
          %v2846 = vpop.f32.mrf.mxu0
          %2847 = vmatprep.mubr.bf16.mxu0 %v1588
          %2848 = vmatmul.mubr.bf16.gmra.mxu0 %v1587
          %v2849 = vpop.f32.mrf.mxu0
          %v2850 = vadd.f32 %v2753, %v2849
          %v2851 = vpop.f32.mrf.mxu0
          %v2852 = vpop.f32.mrf.mxu0
          %v2853 = vadd.f32 %v2756, %v2852
          %v2854 = vpop.f32.mrf.mxu0
          %2855 = vmatprep.mubr.bf16.mxu0 %v1604
          %2856 = vmatmul.mubr.bf16.gmra.mxu0 %v1603
          %v2857 = vpop.f32.mrf.mxu0
          %v2858 = vadd.f32 %v2761, %v2857
          %v2859 = vpop.f32.mrf.mxu0
          %v2860 = vpop.f32.mrf.mxu0
          %v2861 = vadd.f32 %v2764, %v2860
          %v2862 = vpop.f32.mrf.mxu0
          %2863 = vdwg.mxu0
          %2864 = vmatprep.subr.bf16.mxu0 0
          %2865 = vmatpush1.bf16.msra.mxu0 %v2210
          %2866 = vmatprep.subr.bf16.mxu0 0
          %2867 = vmatpush1.bf16.msra.mxu0 %v2209
          %2868 = vmatprep.subr.bf16.mxu0 0
          %2869 = vmatpush1.bf16.msra.mxu0 %v2208
          %2870 = vmatprep.subr.bf16.mxu0 0
          %2871 = vmatpush1.bf16.msra.mxu0 %v2207
          %2872 = vmatprep.subr.bf16.mxu0 0
          %2873 = vmatpush1.bf16.msra.mxu0 %v2206
          %2874 = vmatprep.subr.bf16.mxu0 0
          %2875 = vmatpush1.bf16.msra.mxu0 %v2205
          %2876 = vmatprep.subr.bf16.mxu0 0
          %2877 = vmatpush1.bf16.msra.mxu0 %v2204
          %2878 = vmatprep.subr.bf16.mxu0 0
          %2879 = vmatpush1.bf16.msra.mxu0 %v2203
          %2880 = vmatprep.subr.bf16.mxu0 0
          %2881 = vmatpush2.bf16.msra.mxu0 %v2218
          %2882 = vmatprep.subr.bf16.mxu0 0
          %2883 = vmatpush2.bf16.msra.mxu0 %v2217
          %2884 = vmatprep.subr.bf16.mxu0 0
          %2885 = vmatpush2.bf16.msra.mxu0 %v2216
          %2886 = vmatprep.subr.bf16.mxu0 0
          %2887 = vmatpush2.bf16.msra.mxu0 %v2215
          %2888 = vmatprep.subr.bf16.mxu0 0
          %2889 = vmatpush2.bf16.msra.mxu0 %v2214
          %2890 = vmatprep.subr.bf16.mxu0 0
          %2891 = vmatpush2.bf16.msra.mxu0 %v2213
          %2892 = vmatprep.subr.bf16.mxu0 0
          %2893 = vmatpush2.bf16.msra.mxu0 %v2212
          %2894 = vmatprep.subr.bf16.mxu0 0
          %2895 = vmatpush2.bf16.msra.mxu0 %v2211
          %2896 = vmatprep.mubr.bf16.mxu0 %v1494
          %2897 = vmatmul.mubr.bf16.gmra.mxu0 %v1493
          %v2898 = vpop.f32.mrf.mxu0
          %v2899 = vadd.f32 %v2802, %v2898
          %v2900 = vpop.f32.mrf.mxu0
          %v2901 = vpop.f32.mrf.mxu0
          %v2902 = vadd.f32 %v2805, %v2901
          %v2903 = vpop.f32.mrf.mxu0
          %2904 = vmatprep.mubr.bf16.mxu0 %v1510
          %2905 = vmatmul.mubr.bf16.gmra.mxu0 %v1509
          %v2906 = vpop.f32.mrf.mxu0
          %v2907 = vadd.f32 %v2810, %v2906
          %v2908 = vpop.f32.mrf.mxu0
          %v2909 = vpop.f32.mrf.mxu0
          %v2910 = vadd.f32 %v2813, %v2909
          %v2911 = vpop.f32.mrf.mxu0
          %2912 = vmatprep.mubr.bf16.mxu0 %v1526
          %2913 = vmatmul.mubr.bf16.gmra.mxu0 %v1525
          %v2914 = vpop.f32.mrf.mxu0
          %v2915 = vadd.f32 %v2818, %v2914
          %v2916 = vpop.f32.mrf.mxu0
          %v2917 = vpop.f32.mrf.mxu0
          %v2918 = vadd.f32 %v2821, %v2917
          %v2919 = vpop.f32.mrf.mxu0
          %2920 = vmatprep.mubr.bf16.mxu0 %v1542
          %2921 = vmatmul.mubr.bf16.gmra.mxu0 %v1541
          %v2922 = vpop.f32.mrf.mxu0
          %v2923 = vadd.f32 %v2826, %v2922
          %v2924 = vpop.f32.mrf.mxu0
          %v2925 = vpop.f32.mrf.mxu0
          %v2926 = vadd.f32 %v2829, %v2925
          %v2927 = vpop.f32.mrf.mxu0
          %2928 = vmatprep.mubr.bf16.mxu0 %v1558
          %2929 = vmatmul.mubr.bf16.gmra.mxu0 %v1557
          %v2930 = vpop.f32.mrf.mxu0
          %v2931 = vadd.f32 %v2834, %v2930
          %v2932 = vpop.f32.mrf.mxu0
          %v2933 = vpop.f32.mrf.mxu0
          %v2934 = vadd.f32 %v2837, %v2933
          %v2935 = vpop.f32.mrf.mxu0
          %2936 = vmatprep.mubr.bf16.mxu0 %v1574
          %2937 = vmatmul.mubr.bf16.gmra.mxu0 %v1573
          %v2938 = vpop.f32.mrf.mxu0
          %v2939 = vadd.f32 %v2842, %v2938
          %v2940 = vpop.f32.mrf.mxu0
          %v2941 = vpop.f32.mrf.mxu0
          %v2942 = vadd.f32 %v2845, %v2941
          %v2943 = vpop.f32.mrf.mxu0
          %2944 = vmatprep.mubr.bf16.mxu0 %v1590
          %2945 = vmatmul.mubr.bf16.gmra.mxu0 %v1589
          %v2946 = vpop.f32.mrf.mxu0
          %v2947 = vadd.f32 %v2850, %v2946
          %v2948 = vpop.f32.mrf.mxu0
          %v2949 = vpop.f32.mrf.mxu0
          %v2950 = vadd.f32 %v2853, %v2949
          %v2951 = vpop.f32.mrf.mxu0
          %2952 = vmatprep.mubr.bf16.mxu0 %v1606
          %2953 = vmatmul.mubr.bf16.gmra.mxu0 %v1605
          %v2954 = vpop.f32.mrf.mxu0
          %v2955 = vadd.f32 %v2858, %v2954
          %v2956 = vpop.f32.mrf.mxu0
          %v2957 = vpop.f32.mrf.mxu0
          %v2958 = vadd.f32 %v2861, %v2957
          %v2959 = vpop.f32.mrf.mxu0
          %2960 = vdwg.mxu0
          %2961 = vmatprep.subr.bf16.mxu0 0
          %2962 = vmatpush1.bf16.msra.mxu0 %v2226
          %2963 = vmatprep.subr.bf16.mxu0 0
          %2964 = vmatpush1.bf16.msra.mxu0 %v2225
          %2965 = vmatprep.subr.bf16.mxu0 0
          %2966 = vmatpush1.bf16.msra.mxu0 %v2224
          %2967 = vmatprep.subr.bf16.mxu0 0
          %2968 = vmatpush1.bf16.msra.mxu0 %v2223
          %2969 = vmatprep.subr.bf16.mxu0 0
          %2970 = vmatpush1.bf16.msra.mxu0 %v2222
          %2971 = vmatprep.subr.bf16.mxu0 0
          %2972 = vmatpush1.bf16.msra.mxu0 %v2221
          %2973 = vmatprep.subr.bf16.mxu0 0
          %2974 = vmatpush1.bf16.msra.mxu0 %v2220
          %2975 = vmatprep.subr.bf16.mxu0 0
          %2976 = vmatpush1.bf16.msra.mxu0 %v2219
          %2977 = vmatprep.subr.bf16.mxu0 0
          %2978 = vmatpush2.bf16.msra.mxu0 %v2234
          %2979 = vmatprep.subr.bf16.mxu0 0
          %2980 = vmatpush2.bf16.msra.mxu0 %v2233
          %2981 = vmatprep.subr.bf16.mxu0 0
          %2982 = vmatpush2.bf16.msra.mxu0 %v2232
          %2983 = vmatprep.subr.bf16.mxu0 0
          %2984 = vmatpush2.bf16.msra.mxu0 %v2231
          %2985 = vmatprep.subr.bf16.mxu0 0
          %2986 = vmatpush2.bf16.msra.mxu0 %v2230
          %2987 = vmatprep.subr.bf16.mxu0 0
          %2988 = vmatpush2.bf16.msra.mxu0 %v2229
          %2989 = vmatprep.subr.bf16.mxu0 0
          %2990 = vmatpush2.bf16.msra.mxu0 %v2228
          %2991 = vmatprep.subr.bf16.mxu0 0
          %2992 = vmatpush2.bf16.msra.mxu0 %v2227
          %2993 = vmatprep.mubr.bf16.mxu0 %v1496
          %2994 = vmatmul.mubr.bf16.gmra.mxu0 %v1495
          %v2995 = vpop.f32.mrf.mxu0
          %v2996 = vadd.f32 %v2899, %v2995
          %v2997 = vpop.f32.mrf.mxu0
          %v2998 = vpop.f32.mrf.mxu0
          %v2999 = vadd.f32 %v2902, %v2998
          %v3000 = vpop.f32.mrf.mxu0
          %3001 = vmatprep.mubr.bf16.mxu0 %v1512
          %3002 = vmatmul.mubr.bf16.gmra.mxu0 %v1511
          %v3003 = vpop.f32.mrf.mxu0
          %v3004 = vadd.f32 %v2907, %v3003
          %v3005 = vpop.f32.mrf.mxu0
          %v3006 = vpop.f32.mrf.mxu0
          %v3007 = vadd.f32 %v2910, %v3006
          %v3008 = vpop.f32.mrf.mxu0
          %3009 = vmatprep.mubr.bf16.mxu0 %v1528
          %3010 = vmatmul.mubr.bf16.gmra.mxu0 %v1527
          %v3011 = vpop.f32.mrf.mxu0
          %v3012 = vadd.f32 %v2915, %v3011
          %v3013 = vpop.f32.mrf.mxu0
          %v3014 = vpop.f32.mrf.mxu0
          %v3015 = vadd.f32 %v2918, %v3014
          %v3016 = vpop.f32.mrf.mxu0
          %3017 = vmatprep.mubr.bf16.mxu0 %v1544
          %3018 = vmatmul.mubr.bf16.gmra.mxu0 %v1543
          %v3019 = vpop.f32.mrf.mxu0
          %v3020 = vadd.f32 %v2923, %v3019
          %v3021 = vpop.f32.mrf.mxu0
          %v3022 = vpop.f32.mrf.mxu0
          %v3023 = vadd.f32 %v2926, %v3022
          %v3024 = vpop.f32.mrf.mxu0
          %3025 = vmatprep.mubr.bf16.mxu0 %v1560
          %3026 = vmatmul.mubr.bf16.gmra.mxu0 %v1559
          %v3027 = vpop.f32.mrf.mxu0
          %v3028 = vadd.f32 %v2931, %v3027
          %v3029 = vpop.f32.mrf.mxu0
          %v3030 = vpop.f32.mrf.mxu0
          %v3031 = vadd.f32 %v2934, %v3030
          %v3032 = vpop.f32.mrf.mxu0
          %3033 = vmatprep.mubr.bf16.mxu0 %v1576
          %3034 = vmatmul.mubr.bf16.gmra.mxu0 %v1575
          %v3035 = vpop.f32.mrf.mxu0
          %v3036 = vadd.f32 %v2939, %v3035
          %v3037 = vpop.f32.mrf.mxu0
          %v3038 = vpop.f32.mrf.mxu0
          %v3039 = vadd.f32 %v2942, %v3038
          %v3040 = vpop.f32.mrf.mxu0
          %3041 = vmatprep.mubr.bf16.mxu0 %v1592
          %3042 = vmatmul.mubr.bf16.gmra.mxu0 %v1591
          %v3043 = vpop.f32.mrf.mxu0
          %v3044 = vadd.f32 %v2947, %v3043
          %v3045 = vpop.f32.mrf.mxu0
          %v3046 = vpop.f32.mrf.mxu0
          %v3047 = vadd.f32 %v2950, %v3046
          %v3048 = vpop.f32.mrf.mxu0
          %3049 = vmatprep.mubr.bf16.mxu0 %v1608
          %3050 = vmatmul.mubr.bf16.gmra.mxu0 %v1607
          %v3051 = vpop.f32.mrf.mxu0
          %v3052 = vadd.f32 %v2955, %v3051
          %v3053 = vpop.f32.mrf.mxu0
          %v3054 = vpop.f32.mrf.mxu0
          %v3055 = vadd.f32 %v2958, %v3054
          %v3056 = vpop.f32.mrf.mxu0
          %3057 = vdwg.mxu0
          %3058 = vmatprep.subr.bf16.mxu0 0
          %3059 = vmatpush1.bf16.msra.mxu0 %v2242
          %3060 = vmatprep.subr.bf16.mxu0 0
          %3061 = vmatpush1.bf16.msra.mxu0 %v2241
          %3062 = vmatprep.subr.bf16.mxu0 0
          %3063 = vmatpush1.bf16.msra.mxu0 %v2240
          %3064 = vmatprep.subr.bf16.mxu0 0
          %3065 = vmatpush1.bf16.msra.mxu0 %v2239
          %3066 = vmatprep.subr.bf16.mxu0 0
          %3067 = vmatpush1.bf16.msra.mxu0 %v2238
          %3068 = vmatprep.subr.bf16.mxu0 0
          %3069 = vmatpush1.bf16.msra.mxu0 %v2237
          %3070 = vmatprep.subr.bf16.mxu0 0
          %3071 = vmatpush1.bf16.msra.mxu0 %v2236
          %3072 = vmatprep.subr.bf16.mxu0 0
          %3073 = vmatpush1.bf16.msra.mxu0 %v2235
          %3074 = vmatprep.subr.bf16.mxu0 0
          %3075 = vmatpush2.bf16.msra.mxu0 %v2250
          %3076 = vmatprep.subr.bf16.mxu0 0
          %3077 = vmatpush2.bf16.msra.mxu0 %v2249
          %3078 = vmatprep.subr.bf16.mxu0 0
          %3079 = vmatpush2.bf16.msra.mxu0 %v2248
          %3080 = vmatprep.subr.bf16.mxu0 0
          %3081 = vmatpush2.bf16.msra.mxu0 %v2247
          %3082 = vmatprep.subr.bf16.mxu0 0
          %3083 = vmatpush2.bf16.msra.mxu0 %v2246
          %3084 = vmatprep.subr.bf16.mxu0 0
          %3085 = vmatpush2.bf16.msra.mxu0 %v2245
          %3086 = vmatprep.subr.bf16.mxu0 0
          %3087 = vmatpush2.bf16.msra.mxu0 %v2244
          %3088 = vmatprep.subr.bf16.mxu0 0
          %3089 = vmatpush2.bf16.msra.mxu0 %v2243
          %3090 = vmatprep.mubr.bf16.mxu0 %v1498
          %3091 = vmatmul.mubr.bf16.gmra.mxu0 %v1497
          %v3092 = vpop.f32.mrf.mxu0
          %v3093 = vadd.f32 %v2996, %v3092
          %v3094 = vpop.f32.mrf.mxu0
          %v3095 = vpop.f32.mrf.mxu0
          %v3096 = vadd.f32 %v2999, %v3095
          %v3097 = vpop.f32.mrf.mxu0
          %3098 = vmatprep.mubr.bf16.mxu0 %v1514
          %3099 = vmatmul.mubr.bf16.gmra.mxu0 %v1513
          %v3100 = vpop.f32.mrf.mxu0
          %v3101 = vadd.f32 %v3004, %v3100
          %v3102 = vpop.f32.mrf.mxu0
          %v3103 = vpop.f32.mrf.mxu0
          %v3104 = vadd.f32 %v3007, %v3103
          %v3105 = vpop.f32.mrf.mxu0
          %3106 = vmatprep.mubr.bf16.mxu0 %v1530
          %3107 = vmatmul.mubr.bf16.gmra.mxu0 %v1529
          %v3108 = vpop.f32.mrf.mxu0
          %v3109 = vadd.f32 %v3012, %v3108
          %v3110 = vpop.f32.mrf.mxu0
          %v3111 = vpop.f32.mrf.mxu0
          %v3112 = vadd.f32 %v3015, %v3111
          %v3113 = vpop.f32.mrf.mxu0
          %3114 = vmatprep.mubr.bf16.mxu0 %v1546
          %3115 = vmatmul.mubr.bf16.gmra.mxu0 %v1545
          %v3116 = vpop.f32.mrf.mxu0
          %v3117 = vadd.f32 %v3020, %v3116
          %v3118 = vpop.f32.mrf.mxu0
          %v3119 = vpop.f32.mrf.mxu0
          %v3120 = vadd.f32 %v3023, %v3119
          %v3121 = vpop.f32.mrf.mxu0
          %3122 = vmatprep.mubr.bf16.mxu0 %v1562
          %3123 = vmatmul.mubr.bf16.gmra.mxu0 %v1561
          %v3124 = vpop.f32.mrf.mxu0
          %v3125 = vadd.f32 %v3028, %v3124
          %v3126 = vpop.f32.mrf.mxu0
          %v3127 = vpop.f32.mrf.mxu0
          %v3128 = vadd.f32 %v3031, %v3127
          %v3129 = vpop.f32.mrf.mxu0
          %3130 = vmatprep.mubr.bf16.mxu0 %v1578
          %3131 = vmatmul.mubr.bf16.gmra.mxu0 %v1577
          %v3132 = vpop.f32.mrf.mxu0
          %v3133 = vadd.f32 %v3036, %v3132
          %v3134 = vpop.f32.mrf.mxu0
          %v3135 = vpop.f32.mrf.mxu0
          %v3136 = vadd.f32 %v3039, %v3135
          %v3137 = vpop.f32.mrf.mxu0
          %3138 = vmatprep.mubr.bf16.mxu0 %v1594
          %3139 = vmatmul.mubr.bf16.gmra.mxu0 %v1593
          %v3140 = vpop.f32.mrf.mxu0
          %v3141 = vadd.f32 %v3044, %v3140
          %v3142 = vpop.f32.mrf.mxu0
          %v3143 = vpop.f32.mrf.mxu0
          %v3144 = vadd.f32 %v3047, %v3143
          %v3145 = vpop.f32.mrf.mxu0
          %3146 = vmatprep.mubr.bf16.mxu0 %v1610
          %3147 = vmatmul.mubr.bf16.gmra.mxu0 %v1609
          %v3148 = vpop.f32.mrf.mxu0
          %v3149 = vadd.f32 %v3052, %v3148
          %v3150 = vpop.f32.mrf.mxu0
          %v3151 = vpop.f32.mrf.mxu0
          %v3152 = vadd.f32 %v3055, %v3151
          %v3153 = vpop.f32.mrf.mxu0
          %3154 = vdwg.mxu0
          %3159 = vrot.lane.b32.xlu0 %v3109, 32
          %v3160 = vpop.permute.xlu0 %3159
          %3161 = vrot.lane.b32.xlu0 %v3112, 32
          %v3162 = vpop.permute.xlu0 %3161
          %3163 = vrot.lane.b32.xlu0 %v3117, 32
          %v3164 = vpop.permute.xlu0 %3163
          %3165 = vrot.lane.b32.xlu0 %v3120, 32
          %v3166 = vpop.permute.xlu0 %3165
          %3175 = vrot.lane.b32.xlu0 %v3125, 64
          %v3176 = vpop.permute.xlu0 %3175
          %3177 = vrot.lane.b32.xlu0 %v3128, 64
          %v3178 = vpop.permute.xlu0 %3177
          %3179 = vrot.lane.b32.xlu0 %v3133, 64
          %v3180 = vpop.permute.xlu0 %3179
          %3181 = vrot.lane.b32.xlu0 %v3136, 64
          %v3182 = vpop.permute.xlu0 %3181
          %3191 = vrot.lane.b32.xlu0 %v3141, 96
          %v3192 = vpop.permute.xlu0 %3191
          %3193 = vrot.lane.b32.xlu0 %v3144, 96
          %v3194 = vpop.permute.xlu0 %3193
          %3195 = vrot.lane.b32.xlu0 %v3149, 96
          %v3196 = vpop.permute.xlu0 %3195
          %3197 = vrot.lane.b32.xlu0 %v3152, 96
          %v3198 = vpop.permute.xlu0 %3197
          %vm3203 = vcmask 261120
          %v3204 = vsel %vm3203, %v3093, %v3160
          %v3205 = vsel %vm3203, %v3096, %v3162
          %v3206 = vsel %vm3203, %v3101, %v3164
          %v3207 = vsel %vm3203, %v3104, %v3166
          %v3208 = vsel %vm656, %v3204, %v3176
          %v3209 = vsel %vm656, %v3205, %v3178
          %v3210 = vsel %vm656, %v3206, %v3180
          %v3211 = vsel %vm656, %v3207, %v3182
          %vm3212 = vcmask 785408
          %v3213 = vsel %vm3212, %v3208, %v3192
          %v3214 = vsel %vm3212, %v3209, %v3194
          %v3215 = vsel %vm3212, %v3210, %v3196
          %v3216 = vsel %vm3212, %v3211, %v3198
          %3217 = vst [vmem:[%s277] sm:$0xff] %v3213
          %3218 = vst [vmem:[%s277 + $0x8] sm:$0xff] %v3214
          %3219 = vst [vmem:[%s277 + $0x10] sm:$0xff] %v3215
          %3220 = vst [vmem:[%s277 + $0x18] sm:$0xff] %v3216
        $region52: #{tpu_custom_call.1} parent=39 // pred_fallthru
          _
        %s3221 = sand.u32 %s157, 1
        %s3222 = scalar_lea.sflag [#allocation5], %s3221
        %s3223 = sand.u32 %s157, 1
        %s3224 = smul.addr %s3223, 32
        %s3225 = scalar_lea.vmem [#allocation7], %s3224
        // Predicated region
        $region53: #{tpu_custom_call.1} parent=39 // pred_check
          %p3226 = pneg %p167
        $region54: #{tpu_custom_call.1} parent=39 // pred_check_branch
          %3228 = sbr.rel (%p3226) target = $region56
        $region55: #{tpu_custom_call.1} parent=39 // pred_region
          %s3229 = smul.u32 4, %s27
          %s3231 = ssub.s32 512, 512
          %3232 = vsyncadd %s3222, %s3231
          %s3233 = smul.addr %s3229, 128
          %s3234 = scalar_lea.hbm %s6, %s3233
          %s3235 = sshll.u32 %s3225, 4
          %s3236 = int_to_ptr.vmem [resolvable:$true] %s3235
          %3241 = dma.vmem_to_hbm [thread:$0]  %s3236, 512, %s3234, %s3222, 128, 128, 8
        $region56: #{tpu_custom_call.1} parent=39 // pred_fallthru
          _
      $region40: #{tpu_custom_call.1} parent=5 // pred_fallthru
        _
      %p3242 = scmp.le.s32.totalorder 2, %s22
      // Predicated region
      $region57: #{tpu_custom_call.1} parent=5 // pred_check
        %p3243 = pneg %p3242
      $region58: #{tpu_custom_call.1} parent=5 // pred_check_branch
        %3245 = sbr.rel (%p3243) target = $region60
      $region59: #{tpu_custom_call.1} parent=5 // pred_region
        %s3246 = ssub.s32 %s22, 2
        // Predicated region
        $region61: #{tpu_custom_call.1} parent=59 // pred_check
          %p3247 = pneg %p173
        $region62: #{tpu_custom_call.1} parent=59 // pred_check_branch
          %3249 = sbr.rel (%p3247) target = $region64
        $region63: #{tpu_custom_call.1} parent=59 // pred_region
          %s3250 = sand.u32 %s158, 1
          %s3251 = scalar_lea.sflag [#allocation5], %s3250
          %s3252 = sand.u32 %s158, 1
          %s3253 = smul.addr %s3252, 32
          %s3254 = scalar_lea.vmem [#allocation7], %s3253
          %3255 = dma.done %s3251, 512
        $region64: #{tpu_custom_call.1} parent=59 // pred_fallthru
          _
      $region60: #{tpu_custom_call.1} parent=5 // pred_fallthru
        _
    $region6: #{tpu_custom_call.1} parent=1 // loop_footer
      %s26 = sadd.s32 1, %s22
    $region7: #{tpu_custom_call.1} parent=1 // loop_footer_branch
      %21 = sbr.rel target = $region3
    $region8: #{tpu_custom_call.1} parent=1 // loop_exit
      _
    %3256 = vsyncpa [#allocation5], 1
    %s3257 = scalar_lea.sflag [#allocation5], 1
    %3258 = vsyncpa %s3257, 1
    %3259 = vsyncpa [#allocation6], 1
    %s3260 = scalar_lea.sflag [#allocation6], 1
    %3261 = vsyncpa %s3260, 1

</llo_original>
